<compile_context>
chip_gen: v6e
topology: v6e:2x2x1
jax: 0.10.0
libtpu: 0.0.40
codegen_flags: <defaults>
</compile_context>

<pallas_src>
from functools import partial

import jax
import jax.numpy as jnp
import numpy as np
from jax.experimental import pallas as pl
from jax.experimental.pallas import tpu as pltpu

# dot_general dimension numbers: contract dim 1 of both operands (A @ B^T).
_NT = (((1,), (1,)), ((), ()))


# -----------------------------------------------------------------------------
# Pallas kernel: fused MLP + CrossNetwork + split predict_dense
# -----------------------------------------------------------------------------
def _dcn_kernel(num_cross_layers,
                xv_ref,                    # (TB, D)   bf16 flattened embeddings
                w1_ref, b1_ref,            # (D, H1) bf16, (1, H1) f32
                w2_ref, b2_ref,            # (H1, H2) bf16, (1, H2) f32
                cw_ref, cb_ref,            # (L, D) f32, (L, D) f32
                pwh_ref, pwx_ref, pb_ref,  # (1, H2) bf16, (1, D) bf16, (1, 1) f32
                out_ref):                  # (1, TB)  f32 lane-dense score row
    x0_bf = xv_ref[...]                    # bf16

    # --- MLP branch (eval mode: Dropout = identity, use_bn=False) ---
    h = jnp.dot(x0_bf, w1_ref[...], preferred_element_type=jnp.float32) + b1_ref[...]
    h = jnp.maximum(h, 0.0)
    h = jnp.dot(h.astype(jnp.bfloat16), w2_ref[...],
                preferred_element_type=jnp.float32) + b2_ref[...]
    h = jnp.maximum(h, 0.0)                # (TB, H2) f32

    # --- CrossNetwork branch (f32 state): x = x0 * (x . w_i) + b_i + x ---
    x0 = x0_bf.astype(jnp.float32)
    x = x0
    for i in range(num_cross_layers):
        # Linear(D, 1, bias=False) as VPU mul + XLU lane-reduce (MXU stays free).
        xw = jnp.sum(x * cw_ref[i, :], axis=-1, keepdims=True)   # (TB, 1)
        x = x0 * xw + cb_ref[i, :] + x

    # --- predict_dense, split (no concat), emitted lane-dense as (1, TB) ---
    score = (
        jax.lax.dot_general(pwh_ref[...], h.astype(jnp.bfloat16), _NT,
                            preferred_element_type=jnp.float32)
        + jax.lax.dot_general(pwx_ref[...], x.astype(jnp.bfloat16), _NT,
                              preferred_element_type=jnp.float32)
        + pb_ref[...])                      # (1, TB)
    out_ref[...] = score


# -----------------------------------------------------------------------------
# VMEM scoped-limit estimate (double-buffered activation tiles + resident weights)
# -----------------------------------------------------------------------------
def _vmem_limit_bytes(batch_tile, D, H1, H2, L):
    tile_in = batch_tile * D * 2                     # bf16 xv tile
    tile_out = batch_tile * 4                        # f32 score row
    weights = (D * H1 + H1 * H2 + H2 + D) * 2 + (H1 + H2 + 2 * L * D + 1) * 4
    need = 2 * (tile_in + tile_out) + weights + (8 << 20)   # headroom
    return int(min(max(need, 16 << 20), 48 << 20))   # stay safe on v7x's 64 MiB


# -----------------------------------------------------------------------------
# Wrapper
# -----------------------------------------------------------------------------
def dcn_forward(x_ids, params, *, batch_tile=256):
    emb = params["emb"]                              # (feature_num, emb_dim)
    xv = emb[x_ids]                                  # (B, F, E) — glue gather
    B, F, E = xv.shape
    D = F * E
    xv_bf = xv.reshape(B, D).astype(jnp.bfloat16)    # bf16 at the kernel boundary

    # Pad batch to a multiple of batch_tile (ragged batches supported).
    num_tiles = max(1, (B + batch_tile - 1) // batch_tile)
    Bp = num_tiles * batch_tile
    if Bp != B:
        xv_bf = jnp.pad(xv_bf, ((0, Bp - B), (0, 0)))

    w1 = params["w1"].astype(jnp.bfloat16)
    w2 = params["w2"].astype(jnp.bfloat16)
    b1, b2 = params["b1"], params["b2"]
    cw, cb = params["cross_w"], params["cross_b"]    # (L, D), (L, D) f32
    pw, pb = params["pw"], params["pb"]              # (H2 + D, 1), (1, 1) f32

    L = cw.shape[0]
    H1 = w1.shape[1]
    H2 = w2.shape[1]
    pwh = pw[:H2].reshape(1, H2).astype(jnp.bfloat16)   # split projection rows
    pwx = pw[H2:].reshape(1, D).astype(jnp.bfloat16)

    full = lambda shape: pl.BlockSpec(shape, lambda i: tuple(0 for _ in shape))

    score_rows = pl.pallas_call(
        partial(_dcn_kernel, L),
        out_shape=jax.ShapeDtypeStruct((1, Bp), jnp.float32),
        grid=(num_tiles,),
        in_specs=[
            pl.BlockSpec((batch_tile, D), lambda i: (i, 0)),  # xv tile
            full((D, H1)), full((1, H1)),
            full((H1, H2)), full((1, H2)),
            full((L, D)), full((L, D)),
            full((1, H2)), full((1, D)), full((1, 1)),
        ],
        out_specs=pl.BlockSpec((1, batch_tile), lambda i: (0, i)),
        compiler_params=pltpu.CompilerParams(
            dimension_semantics=("parallel",),
            vmem_limit_bytes=_vmem_limit_bytes(batch_tile, D, H1, H2, L)),
    )(xv_bf, w1, b1, w2, b2, cw, cb, pwh, pwx, pb)

    return score_rows[0, :B]                         # squeeze + drop padding


# -----------------------------------------------------------------------------
# Pure-JAX reference (mirrors the PyTorch forward; same bf16-input / f32-acc
# numerics as the kernel so the check stays tight)
# -----------------------------------------------------------------------------
def dcn_reference(x_ids, params):
    bf = lambda a: a.astype(jnp.bfloat16).astype(jnp.float32)
    xv = params["emb"][x_ids]
    B = xv.shape[0]
    x0 = bf(xv.reshape(B, -1))

    h = jnp.maximum(x0 @ bf(params["w1"]) + params["b1"], 0.0)
    h = jnp.maximum(bf(h) @ bf(params["w2"]) + params["b2"], 0.0)

    x = x0
    for i in range(params["cross_w"].shape[0]):
        xw = jnp.sum(x * params["cross_w"][i], axis=-1, keepdims=True)
        x = x0 * xw + params["cross_b"][i] + x

    out = jnp.concatenate([bf(h), bf(x)], axis=1)
    score = out @ bf(params["pw"]) + params["pb"]
    return score[:, 0]


# -----------------------------------------------------------------------------
# Deterministic parameter init (shapes follow the PyTorch module __init__)
# -----------------------------------------------------------------------------
def init_params(key, *, feature_num, field_num, emb_dim, mlp_dims):
    D = field_num * emb_dim                          # embed_output_dim
    H1, H2 = mlp_dims
    L = len(mlp_dims)                                # cross-net layers

    ks = jax.random.split(key, 8)
    u = lambda k, shape, fan_in: jax.random.uniform(
        k, shape, jnp.float32, -1.0 / np.sqrt(fan_in), 1.0 / np.sqrt(fan_in))

    return {
        "emb": 0.01 * jax.random.normal(ks[0], (feature_num, emb_dim), jnp.float32),
        # MLP Linear(D, H1), Linear(H1, H2) — stored as (in, out)
        "w1": u(ks[1], (D, H1), D),
        "b1": u(ks[2], (1, H1), D),
        "w2": u(ks[3], (H1, H2), H1),
        "b2": u(ks[4], (1, H2), H1),
        # CrossNetwork: L x Linear(D, 1, bias=False) weights + zero biases
        "cross_w": u(ks[5], (L, D), D),
        "cross_b": jnp.zeros((L, D), jnp.float32),
        # predict_dense: Linear(H2 + D, 1)
        "pw": u(ks[6], (H2 + D, 1), H2 + D),
        "pb": u(ks[7], (1, 1), H2 + D),
    }


if __name__ == "__main__":
    # Config: field_num=4, emb_dim=8 -> embed_output_dim=32, mlp_dims=(32, 16)
    # (so the cross-net has 2 layers), feature_num=1000.  Batch 300 is
    # deliberately not a multiple of batch_tile to exercise the padding path.
    feature_num, field_num, emb_dim = 1000, 4, 8
    mlp_dims = (32, 16)
    B = 300

    key = jax.random.PRNGKey(0)
    pkey, xkey = jax.random.split(key)
    params = init_params(pkey, feature_num=feature_num, field_num=field_num,
                         emb_dim=emb_dim, mlp_dims=mlp_dims)
    x_ids = jax.random.randint(xkey, (B, field_num), 0, feature_num, jnp.int32)

    score = jax.block_until_ready(dcn_forward(x_ids, params, batch_tile=256))
    ref = jax.block_until_ready(dcn_reference(x_ids, params))
    np.testing.assert_allclose(np.asarray(score), np.asarray(ref),
                               rtol=1e-3, atol=1e-5)
    print("KERNEL_OK")
</pallas_src>

<mosaic_0001>
module attributes {stable_mosaic.version = 11 : i64} {
  func.func @_dcn_kernel(%arg0: i32, %arg1: memref<256x32xbf16, #tpu.memory_space<vmem>>, %arg2: memref<32x32xbf16, #tpu.memory_space<vmem>>, %arg3: memref<1x32xf32, #tpu.memory_space<vmem>>, %arg4: memref<32x16xbf16, #tpu.memory_space<vmem>>, %arg5: memref<1x16xf32, #tpu.memory_space<vmem>>, %arg6: memref<2x32xf32, #tpu.memory_space<vmem>>, %arg7: memref<2x32xf32, #tpu.memory_space<vmem>>, %arg8: memref<1x16xbf16, #tpu.memory_space<vmem>>, %arg9: memref<1x32xbf16, #tpu.memory_space<vmem>>, %arg10: memref<1x1xf32, #tpu.memory_space<vmem>>, %arg11: memref<1x256xf32, #tpu.memory_space<vmem>>) attributes {dimension_semantics = [#tpu.dimension_semantics<parallel>], iteration_bounds = array<i64: 2>, scalar_prefetch = 0 : i64, scratch_operands = 0 : i64, tpu.core_type = #tpu.core_type<tc>, window_params = [{transform_indices = @transform_0, window_bounds = array<i64: 256, 32>}, {pipeline_mode = #tpu.pipeline_mode<synchronous>, transform_indices = @transform_1, window_bounds = array<i64: 32, 32>}, {pipeline_mode = #tpu.pipeline_mode<synchronous>, transform_indices = @transform_2, window_bounds = array<i64: 1, 32>}, {pipeline_mode = #tpu.pipeline_mode<synchronous>, transform_indices = @transform_3, window_bounds = array<i64: 32, 16>}, {pipeline_mode = #tpu.pipeline_mode<synchronous>, transform_indices = @transform_4, window_bounds = array<i64: 1, 16>}, {pipeline_mode = #tpu.pipeline_mode<synchronous>, transform_indices = @transform_5, window_bounds = array<i64: 2, 32>}, {pipeline_mode = #tpu.pipeline_mode<synchronous>, transform_indices = @transform_6, window_bounds = array<i64: 2, 32>}, {pipeline_mode = #tpu.pipeline_mode<synchronous>, transform_indices = @transform_7, window_bounds = array<i64: 1, 16>}, {pipeline_mode = #tpu.pipeline_mode<synchronous>, transform_indices = @transform_8, window_bounds = array<i64: 1, 32>}, {pipeline_mode = #tpu.pipeline_mode<synchronous>, transform_indices = @transform_9, window_bounds = array<i64: 1, 1>}, {transform_indices = @transform_10, window_bounds = array<i64: 1, 256>}]} {
    %c0 = arith.constant 0 : index
    %c0_0 = arith.constant 0 : index
    %0 = vector.load %arg1[%c0, %c0_0] : memref<256x32xbf16, #tpu.memory_space<vmem>>, vector<256x32xbf16>
    %c0_1 = arith.constant 0 : index
    %c0_2 = arith.constant 0 : index
    %1 = vector.load %arg2[%c0_1, %c0_2] : memref<32x32xbf16, #tpu.memory_space<vmem>>, vector<32x32xbf16>
    %cst = arith.constant dense<0.000000e+00> : vector<256x32xf32>
    %2 = tpu.matmul %0, %1, %cst {dimension_numbers = #tpu.dot_dimension_numbers<[1], [0], [0], [1], [0, 0, 1, 1], [], []>} : vector<256x32xbf16>, vector<32x32xbf16>, vector<256x32xf32> -> vector<256x32xf32>
    %c0_3 = arith.constant 0 : index
    %c0_4 = arith.constant 0 : index
    %3 = vector.load %arg3[%c0_3, %c0_4] : memref<1x32xf32, #tpu.memory_space<vmem>>, vector<1x32xf32>
    %4 = vector.broadcast %3 : vector<1x32xf32> to vector<256x32xf32>
    %5 = arith.addf %2, %4 : vector<256x32xf32>
    %cst_5 = arith.constant 0.000000e+00 : f32
    %6 = vector.broadcast %cst_5 : f32 to vector<256x32xf32>
    %7 = arith.maximumf %5, %6 : vector<256x32xf32>
    %8 = arith.truncf %7 : vector<256x32xf32> to vector<256x32xbf16>
    %c0_6 = arith.constant 0 : index
    %c0_7 = arith.constant 0 : index
    %9 = vector.load %arg4[%c0_6, %c0_7] : memref<32x16xbf16, #tpu.memory_space<vmem>>, vector<32x16xbf16>
    %cst_8 = arith.constant dense<0.000000e+00> : vector<256x16xf32>
    %10 = tpu.matmul %8, %9, %cst_8 {dimension_numbers = #tpu.dot_dimension_numbers<[1], [0], [0], [1], [0, 0, 1, 1], [], []>} : vector<256x32xbf16>, vector<32x16xbf16>, vector<256x16xf32> -> vector<256x16xf32>
    %c0_9 = arith.constant 0 : index
    %c0_10 = arith.constant 0 : index
    %11 = vector.load %arg5[%c0_9, %c0_10] : memref<1x16xf32, #tpu.memory_space<vmem>>, vector<1x16xf32>
    %12 = vector.broadcast %11 : vector<1x16xf32> to vector<256x16xf32>
    %13 = arith.addf %10, %12 : vector<256x16xf32>
    %cst_11 = arith.constant 0.000000e+00 : f32
    %14 = vector.broadcast %cst_11 : f32 to vector<256x16xf32>
    %15 = arith.maximumf %13, %14 : vector<256x16xf32>
    %16 = arith.extf %0 : vector<256x32xbf16> to vector<256x32xf32>
    %c0_12 = arith.constant 0 : index
    %c0_13 = arith.constant 0 : index
    %17 = vector.load %arg6[%c0_12, %c0_13] : memref<2x32xf32, #tpu.memory_space<vmem>>, vector<1x32xf32>
    %18 = vector.shape_cast %17 : vector<1x32xf32> to vector<32xf32>
    %19 = vector.shape_cast %18 : vector<32xf32> to vector<1x32xf32>
    %20 = vector.broadcast %19 : vector<1x32xf32> to vector<256x32xf32>
    %21 = arith.mulf %16, %20 : vector<256x32xf32>
    %cst_14 = arith.constant dense<0.000000e+00> : vector<256xf32>
    %22 = vector.multi_reduction <add>, %21, %cst_14 [1] : vector<256x32xf32> to vector<256xf32>
    %23 = vector.shape_cast %22 : vector<256xf32> to vector<256x1xf32>
    %24 = vector.broadcast %23 : vector<256x1xf32> to vector<256x32xf32>
    %25 = arith.mulf %16, %24 : vector<256x32xf32>
    %c0_15 = arith.constant 0 : index
    %c0_16 = arith.constant 0 : index
    %26 = vector.load %arg7[%c0_15, %c0_16] : memref<2x32xf32, #tpu.memory_space<vmem>>, vector<1x32xf32>
    %27 = vector.shape_cast %26 : vector<1x32xf32> to vector<32xf32>
    %28 = vector.shape_cast %27 : vector<32xf32> to vector<1x32xf32>
    %29 = vector.broadcast %28 : vector<1x32xf32> to vector<256x32xf32>
    %30 = arith.addf %25, %29 : vector<256x32xf32>
    %31 = arith.addf %30, %16 : vector<256x32xf32>
    %c1 = arith.constant 1 : index
    %c0_17 = arith.constant 0 : index
    %32 = vector.load %arg6[%c1, %c0_17] : memref<2x32xf32, #tpu.memory_space<vmem>>, vector<1x32xf32>
    %33 = vector.shape_cast %32 : vector<1x32xf32> to vector<32xf32>
    %34 = vector.shape_cast %33 : vector<32xf32> to vector<1x32xf32>
    %35 = vector.broadcast %34 : vector<1x32xf32> to vector<256x32xf32>
    %36 = arith.mulf %31, %35 : vector<256x32xf32>
    %cst_18 = arith.constant dense<0.000000e+00> : vector<256xf32>
    %37 = vector.multi_reduction <add>, %36, %cst_18 [1] : vector<256x32xf32> to vector<256xf32>
    %38 = vector.shape_cast %37 : vector<256xf32> to vector<256x1xf32>
    %39 = vector.broadcast %38 : vector<256x1xf32> to vector<256x32xf32>
    %40 = arith.mulf %16, %39 : vector<256x32xf32>
    %c1_19 = arith.constant 1 : index
    %c0_20 = arith.constant 0 : index
    %41 = vector.load %arg7[%c1_19, %c0_20] : memref<2x32xf32, #tpu.memory_space<vmem>>, vector<1x32xf32>
    %42 = vector.shape_cast %41 : vector<1x32xf32> to vector<32xf32>
    %43 = vector.shape_cast %42 : vector<32xf32> to vector<1x32xf32>
    %44 = vector.broadcast %43 : vector<1x32xf32> to vector<256x32xf32>
    %45 = arith.addf %40, %44 : vector<256x32xf32>
    %46 = arith.addf %45, %31 : vector<256x32xf32>
    %c0_21 = arith.constant 0 : index
    %c0_22 = arith.constant 0 : index
    %47 = vector.load %arg8[%c0_21, %c0_22] : memref<1x16xbf16, #tpu.memory_space<vmem>>, vector<1x16xbf16>
    %48 = arith.truncf %15 : vector<256x16xf32> to vector<256x16xbf16>
    %cst_23 = arith.constant dense<0.000000e+00> : vector<1x256xf32>
    %49 = tpu.matmul %47, %48, %cst_23 {dimension_numbers = #tpu.dot_dimension_numbers<[1], [1], [0], [0], [0, 0, 1, 0], [], []>} : vector<1x16xbf16>, vector<256x16xbf16>, vector<1x256xf32> -> vector<1x256xf32>
    %c0_24 = arith.constant 0 : index
    %c0_25 = arith.constant 0 : index
    %50 = vector.load %arg9[%c0_24, %c0_25] : memref<1x32xbf16, #tpu.memory_space<vmem>>, vector<1x32xbf16>
    %51 = arith.truncf %46 : vector<256x32xf32> to vector<256x32xbf16>
    %cst_26 = arith.constant dense<0.000000e+00> : vector<1x256xf32>
    %52 = tpu.matmul %50, %51, %cst_26 {dimension_numbers = #tpu.dot_dimension_numbers<[1], [1], [0], [0], [0, 0, 1, 0], [], []>} : vector<1x32xbf16>, vector<256x32xbf16>, vector<1x256xf32> -> vector<1x256xf32>
    %53 = arith.addf %49, %52 : vector<1x256xf32>
    %c0_27 = arith.constant 0 : index
    %c0_28 = arith.constant 0 : index
    %54 = vector.load %arg10[%c0_27, %c0_28] : memref<1x1xf32, #tpu.memory_space<vmem>>, vector<1x1xf32>
    %55 = vector.broadcast %54 : vector<1x1xf32> to vector<1x256xf32>
    %56 = arith.addf %53, %55 : vector<1x256xf32>
    %c0_29 = arith.constant 0 : index
    %c0_30 = arith.constant 0 : index
    %57 = vector.load %arg11[%c0_29, %c0_30] : memref<1x256xf32, #tpu.memory_space<vmem>>, vector<1x256xf32>
    tpu.vector_store %arg11[%c0_29, %c0_30], %56 {strides = array<i32>} : memref<1x256xf32, #tpu.memory_space<vmem>>, vector<1x256xf32>,
    return
  }
  func.func @transform_0(%arg0: i32) -> (i32, i32) {
    %c0_i32 = arith.constant 0 : i32
    %c0_i32_0 = arith.constant 0 : i32
    return %arg0, %c0_i32 : i32, i32
  }
  func.func @transform_1(%arg0: i32) -> (i32, i32) {
    %c0_i32 = arith.constant 0 : i32
    %c0_i32_0 = arith.constant 0 : i32
    %c0_i32_1 = arith.constant 0 : i32
    return %c0_i32, %c0_i32_0 : i32, i32
  }
  func.func @transform_2(%arg0: i32) -> (i32, i32) {
    %c0_i32 = arith.constant 0 : i32
    %c0_i32_0 = arith.constant 0 : i32
    %c0_i32_1 = arith.constant 0 : i32
    return %c0_i32, %c0_i32_0 : i32, i32
  }
  func.func @transform_3(%arg0: i32) -> (i32, i32) {
    %c0_i32 = arith.constant 0 : i32
    %c0_i32_0 = arith.constant 0 : i32
    %c0_i32_1 = arith.constant 0 : i32
    return %c0_i32, %c0_i32_0 : i32, i32
  }
  func.func @transform_4(%arg0: i32) -> (i32, i32) {
    %c0_i32 = arith.constant 0 : i32
    %c0_i32_0 = arith.constant 0 : i32
    %c0_i32_1 = arith.constant 0 : i32
    return %c0_i32, %c0_i32_0 : i32, i32
  }
  func.func @transform_5(%arg0: i32) -> (i32, i32) {
    %c0_i32 = arith.constant 0 : i32
    %c0_i32_0 = arith.constant 0 : i32
    %c0_i32_1 = arith.constant 0 : i32
    return %c0_i32, %c0_i32_0 : i32, i32
  }
  func.func @transform_6(%arg0: i32) -> (i32, i32) {
    %c0_i32 = arith.constant 0 : i32
    %c0_i32_0 = arith.constant 0 : i32
    %c0_i32_1 = arith.constant 0 : i32
    return %c0_i32, %c0_i32_0 : i32, i32
  }
  func.func @transform_7(%arg0: i32) -> (i32, i32) {
    %c0_i32 = arith.constant 0 : i32
    %c0_i32_0 = arith.constant 0 : i32
    %c0_i32_1 = arith.constant 0 : i32
    return %c0_i32, %c0_i32_0 : i32, i32
  }
  func.func @transform_8(%arg0: i32) -> (i32, i32) {
    %c0_i32 = arith.constant 0 : i32
    %c0_i32_0 = arith.constant 0 : i32
    %c0_i32_1 = arith.constant 0 : i32
    return %c0_i32, %c0_i32_0 : i32, i32
  }
  func.func @transform_9(%arg0: i32) -> (i32, i32) {
    %c0_i32 = arith.constant 0 : i32
    %c0_i32_0 = arith.constant 0 : i32
    %c0_i32_1 = arith.constant 0 : i32
    return %c0_i32, %c0_i32_0 : i32, i32
  }
  func.func @transform_10(%arg0: i32) -> (i32, i32) {
    %c0_i32 = arith.constant 0 : i32
    %c0_i32_0 = arith.constant 0 : i32
    return %c0_i32, %arg0 : i32, i32
  }
}

</mosaic_0001>

<llo_original>
// kernel: tpu_custom_call.1
$region0: #{tpu_custom_call.1}
  #allocation0 [shape = 'u32[]', space=smem, size = 0x4, offset = 0x4, fixed_abs, tag = 'smem constant byte address 0x4 - core index']
  #allocation1 [shape = 'u32[144,128]{1,0:T(1,128)}', space=vmem, size = 0x12000, scoped, tag = 'internal scratch']
  #allocation2 [shape = 'f32[1,1]{1,0:T(1,128)S(1)}', space=vmem, size = 0x200, scoped, tag = 'scoped memory for tpu_custom_call.1']
  %s0 = inlined_call_operand.vmem [shape: bf16[512,32], index: 0, kind: input, shape index: {}]
  %s1 = inlined_call_operand.vmem [shape: bf16[32,32], index: 1, kind: input, shape index: {}]
  %s2 = inlined_call_operand.vmem [shape: f32[1,32], index: 2, kind: input, shape index: {}]
  %s3 = inlined_call_operand.vmem [shape: bf16[32,16], index: 3, kind: input, shape index: {}]
  %s4 = inlined_call_operand.vmem [shape: f32[1,16], index: 4, kind: input, shape index: {}]
  %s5 = inlined_call_operand.vmem [shape: f32[2,32], index: 5, kind: input, shape index: {}]
  %s6 = inlined_call_operand.vmem [shape: f32[2,32], index: 6, kind: input, shape index: {}]
  %s7 = inlined_call_operand.vmem [shape: bf16[1,16], index: 7, kind: input, shape index: {}]
  %s8 = inlined_call_operand.vmem [shape: bf16[1,32], index: 8, kind: input, shape index: {}]
  %s9 = inlined_call_operand.<no memory space> [shape: f32[1,1], index: 9, kind: input, shape index: {}]
  %s10 = inlined_call_operand.hbm [shape: f32[1,512], index: 10, kind: output, shape index: {}]
  %s11 = sld [smem:[#allocation0]]
  $region73: #{tpu_custom_call.1} parent=0
    _
  %s13 = ssub.s32 1, %s11
  %s14 = scalar_select 0, %s13, %s11
  %v15 = vstv %s9
  %16 = vst [vmem:[#allocation2] sm:$0x1] %v15
  $region1: #{tpu_custom_call.1} parent=0
    #allocation3 [shape = 'u8[2048]{0}', space=vmem, size = 0x800, scoped, tag = 'output window, operand 0']
    #allocation4 [shape = 's32[2]{0}', space=sflag, size = 0x8, scoped, tag = 'scoped memory for tpu_custom_call.1']
    %17 = vsyncpa [#allocation4], 0
    %s18 = scalar_lea.sflag [#allocation4], 1
    %19 = vsyncpa %s18, 0
    loop: start=0, step=1, limit=4
    $region2: #{tpu_custom_call.1} parent=1 // loop_pre_header
      _
    $region3: #{tpu_custom_call.1} parent=1 // loop_header
      %s21 = sphi 0, %s25
      %p22 = scmp.ge.s32.totalorder %s21, 4
      %s31 = sphi 0, %s33
      %s34 = sphi 0, %s31
      %s35 = sphi 0, %s34
      %s51 = sphi 0, %s35
      %s55 = sphi 0, %s55
      %s57 = sphi 0, %s55
      %s58 = sphi 0, %s57
      %s72 = sphi 0, %s58
      %s76 = sphi 0, %s76
      %s78 = sphi 0, %s76
      %s79 = sphi 0, %s78
      %s93 = sphi 0, %s79
      %s97 = sphi 0, %s97
      %s99 = sphi 0, %s97
      %s100 = sphi 0, %s99
      %s114 = sphi 0, %s100
      %s118 = sphi 0, %s118
      %s120 = sphi 0, %s118
      %s121 = sphi 0, %s120
      %s135 = sphi 0, %s121
      %s139 = sphi 0, %s139
      %s141 = sphi 0, %s139
      %s142 = sphi 0, %s141
      %s156 = sphi 0, %s142
      %s160 = sphi 0, %s160
      %s162 = sphi 0, %s160
      %s163 = sphi 0, %s162
      %s177 = sphi 0, %s163
      %s181 = sphi 0, %s181
      %s183 = sphi 0, %s181
      %s184 = sphi 0, %s183
      %s198 = sphi 0, %s184
      %s202 = sphi 0, %s202
      %s204 = sphi 0, %s202
      %s205 = sphi 0, %s204
      %s219 = sphi 0, %s205
      %s223 = sphi 0, %s223
      %s225 = sphi 0, %s223
      %s226 = sphi 0, %s225
      %s240 = sphi 0, %s226
      %s246 = sphi 0, %s248
      %s249 = sphi 0, %s246
      %s250 = sphi 0, %s249
      %s266 = sphi 0, %s250
    $region4: #{tpu_custom_call.1} parent=1 // loop_header_branch
      %24 = sbr.rel (%p22) target = $region8
    $region5: #{tpu_custom_call.1} parent=1 // loop_body
      %s26 = ssub.s32 %s21, 1
      %s27 = ssub.s32 %s21, 2
      %s28 = sadd.s32 %s21, 1
      %s29 = ssub.s32 %s21, %s28
      %p30 = scmp.eq.s32.totalorder %s29, 0
      %s32 = sadd.s32 %s31, 1
      %s33 = scalar_select %p30, %s31, %s32
      %p36 = pneg %p30
      %p37 = scmp.eq.s32.totalorder %s21, 1
      %p38 = por %p36, %p37
      %p39 = scmp.ne.s32.totalorder %s31, %s34
      %p40 = scmp.eq.s32.totalorder %s21, 0
      %p41 = por %p39, %p40
      %p42 = scmp.ne.s32.totalorder %s31, %s34
      %p43 = scmp.eq.s32.totalorder %s26, 1
      %p44 = por %p42, %p43
      %p45 = scmp.ne.s32.totalorder %s34, %s35
      %p46 = scmp.eq.s32.totalorder %s26, 0
      %p47 = por %p45, %p46
      %p48 = scmp.ne.s32.totalorder %s34, %s35
      %p49 = scmp.eq.s32.totalorder %s27, 1
      %p50 = por %p48, %p49
      %p52 = scmp.ne.s32.totalorder %s35, %s51
      %p53 = scmp.eq.s32.totalorder %s27, 0
      %p54 = por %p52, %p53
      %s56 = sadd.s32 %s55, 1
      %p59 = scmp.eq.s32.totalorder %s21, 1
      %p60 = scmp.ne.s32.totalorder %s55, %s57
      %p61 = scmp.eq.s32.totalorder %s21, 0
      %p62 = por %p60, %p61
      %p63 = scmp.ne.s32.totalorder %s55, %s57
      %p64 = scmp.eq.s32.totalorder %s26, 1
      %p65 = por %p63, %p64
      %p66 = scmp.ne.s32.totalorder %s57, %s58
      %p67 = scmp.eq.s32.totalorder %s26, 0
      %p68 = por %p66, %p67
      %p69 = scmp.ne.s32.totalorder %s57, %s58
      %p70 = scmp.eq.s32.totalorder %s27, 1
      %p71 = por %p69, %p70
      %p73 = scmp.ne.s32.totalorder %s58, %s72
      %p74 = scmp.eq.s32.totalorder %s27, 0
      %p75 = por %p73, %p74
      %s77 = sadd.s32 %s76, 1
      %p80 = scmp.eq.s32.totalorder %s21, 1
      %p81 = scmp.ne.s32.totalorder %s76, %s78
      %p82 = scmp.eq.s32.totalorder %s21, 0
      %p83 = por %p81, %p82
      %p84 = scmp.ne.s32.totalorder %s76, %s78
      %p85 = scmp.eq.s32.totalorder %s26, 1
      %p86 = por %p84, %p85
      %p87 = scmp.ne.s32.totalorder %s78, %s79
      %p88 = scmp.eq.s32.totalorder %s26, 0
      %p89 = por %p87, %p88
      %p90 = scmp.ne.s32.totalorder %s78, %s79
      %p91 = scmp.eq.s32.totalorder %s27, 1
      %p92 = por %p90, %p91
      %p94 = scmp.ne.s32.totalorder %s79, %s93
      %p95 = scmp.eq.s32.totalorder %s27, 0
      %p96 = por %p94, %p95
      %s98 = sadd.s32 %s97, 1
      %p101 = scmp.eq.s32.totalorder %s21, 1
      %p102 = scmp.ne.s32.totalorder %s97, %s99
      %p103 = scmp.eq.s32.totalorder %s21, 0
      %p104 = por %p102, %p103
      %p105 = scmp.ne.s32.totalorder %s97, %s99
      %p106 = scmp.eq.s32.totalorder %s26, 1
      %p107 = por %p105, %p106
      %p108 = scmp.ne.s32.totalorder %s99, %s100
      %p109 = scmp.eq.s32.totalorder %s26, 0
      %p110 = por %p108, %p109
      %p111 = scmp.ne.s32.totalorder %s99, %s100
      %p112 = scmp.eq.s32.totalorder %s27, 1
      %p113 = por %p111, %p112
      %p115 = scmp.ne.s32.totalorder %s100, %s114
      %p116 = scmp.eq.s32.totalorder %s27, 0
      %p117 = por %p115, %p116
      %s119 = sadd.s32 %s118, 1
      %p122 = scmp.eq.s32.totalorder %s21, 1
      %p123 = scmp.ne.s32.totalorder %s118, %s120
      %p124 = scmp.eq.s32.totalorder %s21, 0
      %p125 = por %p123, %p124
      %p126 = scmp.ne.s32.totalorder %s118, %s120
      %p127 = scmp.eq.s32.totalorder %s26, 1
      %p128 = por %p126, %p127
      %p129 = scmp.ne.s32.totalorder %s120, %s121
      %p130 = scmp.eq.s32.totalorder %s26, 0
      %p131 = por %p129, %p130
      %p132 = scmp.ne.s32.totalorder %s120, %s121
      %p133 = scmp.eq.s32.totalorder %s27, 1
      %p134 = por %p132, %p133
      %p136 = scmp.ne.s32.totalorder %s121, %s135
      %p137 = scmp.eq.s32.totalorder %s27, 0
      %p138 = por %p136, %p137
      %s140 = sadd.s32 %s139, 1
      %p143 = scmp.eq.s32.totalorder %s21, 1
      %p144 = scmp.ne.s32.totalorder %s139, %s141
      %p145 = scmp.eq.s32.totalorder %s21, 0
      %p146 = por %p144, %p145
      %p147 = scmp.ne.s32.totalorder %s139, %s141
      %p148 = scmp.eq.s32.totalorder %s26, 1
      %p149 = por %p147, %p148
      %p150 = scmp.ne.s32.totalorder %s141, %s142
      %p151 = scmp.eq.s32.totalorder %s26, 0
      %p152 = por %p150, %p151
      %p153 = scmp.ne.s32.totalorder %s141, %s142
      %p154 = scmp.eq.s32.totalorder %s27, 1
      %p155 = por %p153, %p154
      %p157 = scmp.ne.s32.totalorder %s142, %s156
      %p158 = scmp.eq.s32.totalorder %s27, 0
      %p159 = por %p157, %p158
      %s161 = sadd.s32 %s160, 1
      %p164 = scmp.eq.s32.totalorder %s21, 1
      %p165 = scmp.ne.s32.totalorder %s160, %s162
      %p166 = scmp.eq.s32.totalorder %s21, 0
      %p167 = por %p165, %p166
      %p168 = scmp.ne.s32.totalorder %s160, %s162
      %p169 = scmp.eq.s32.totalorder %s26, 1
      %p170 = por %p168, %p169
      %p171 = scmp.ne.s32.totalorder %s162, %s163
      %p172 = scmp.eq.s32.totalorder %s26, 0
      %p173 = por %p171, %p172
      %p174 = scmp.ne.s32.totalorder %s162, %s163
      %p175 = scmp.eq.s32.totalorder %s27, 1
      %p176 = por %p174, %p175
      %p178 = scmp.ne.s32.totalorder %s163, %s177
      %p179 = scmp.eq.s32.totalorder %s27, 0
      %p180 = por %p178, %p179
      %s182 = sadd.s32 %s181, 1
      %p185 = scmp.eq.s32.totalorder %s21, 1
      %p186 = scmp.ne.s32.totalorder %s181, %s183
      %p187 = scmp.eq.s32.totalorder %s21, 0
      %p188 = por %p186, %p187
      %p189 = scmp.ne.s32.totalorder %s181, %s183
      %p190 = scmp.eq.s32.totalorder %s26, 1
      %p191 = por %p189, %p190
      %p192 = scmp.ne.s32.totalorder %s183, %s184
      %p193 = scmp.eq.s32.totalorder %s26, 0
      %p194 = por %p192, %p193
      %p195 = scmp.ne.s32.totalorder %s183, %s184
      %p196 = scmp.eq.s32.totalorder %s27, 1
      %p197 = por %p195, %p196
      %p199 = scmp.ne.s32.totalorder %s184, %s198
      %p200 = scmp.eq.s32.totalorder %s27, 0
      %p201 = por %p199, %p200
      %s203 = sadd.s32 %s202, 1
      %p206 = scmp.eq.s32.totalorder %s21, 1
      %p207 = scmp.ne.s32.totalorder %s202, %s204
      %p208 = scmp.eq.s32.totalorder %s21, 0
      %p209 = por %p207, %p208
      %p210 = scmp.ne.s32.totalorder %s202, %s204
      %p211 = scmp.eq.s32.totalorder %s26, 1
      %p212 = por %p210, %p211
      %p213 = scmp.ne.s32.totalorder %s204, %s205
      %p214 = scmp.eq.s32.totalorder %s26, 0
      %p215 = por %p213, %p214
      %p216 = scmp.ne.s32.totalorder %s204, %s205
      %p217 = scmp.eq.s32.totalorder %s27, 1
      %p218 = por %p216, %p217
      %p220 = scmp.ne.s32.totalorder %s205, %s219
      %p221 = scmp.eq.s32.totalorder %s27, 0
      %p222 = por %p220, %p221
      %s224 = sadd.s32 %s223, 1
      %p227 = scmp.eq.s32.totalorder %s21, 1
      %p228 = scmp.ne.s32.totalorder %s223, %s225
      %p229 = scmp.eq.s32.totalorder %s21, 0
      %p230 = por %p228, %p229
      %p231 = scmp.ne.s32.totalorder %s223, %s225
      %p232 = scmp.eq.s32.totalorder %s26, 1
      %p233 = por %p231, %p232
      %p234 = scmp.ne.s32.totalorder %s225, %s226
      %p235 = scmp.eq.s32.totalorder %s26, 0
      %p236 = por %p234, %p235
      %p237 = scmp.ne.s32.totalorder %s225, %s226
      %p238 = scmp.eq.s32.totalorder %s27, 1
      %p239 = por %p237, %p238
      %p241 = scmp.ne.s32.totalorder %s226, %s240
      %p242 = scmp.eq.s32.totalorder %s27, 0
      %p243 = por %p241, %p242
      %s244 = ssub.s32 %s21, %s28
      %p245 = scmp.eq.s32.totalorder %s244, 0
      %s247 = sadd.s32 %s246, 1
      %s248 = scalar_select %p245, %s246, %s247
      %p251 = pneg %p245
      %p252 = scmp.eq.s32.totalorder %s21, 1
      %p253 = por %p251, %p252
      %p254 = scmp.ne.s32.totalorder %s246, %s249
      %p255 = scmp.eq.s32.totalorder %s21, 0
      %p256 = por %p254, %p255
      %p257 = scmp.ne.s32.totalorder %s246, %s249
      %p258 = scmp.eq.s32.totalorder %s26, 1
      %p259 = por %p257, %p258
      %p260 = scmp.ne.s32.totalorder %s249, %s250
      %p261 = scmp.eq.s32.totalorder %s26, 0
      %p262 = por %p260, %p261
      %p263 = scmp.ne.s32.totalorder %s249, %s250
      %p264 = scmp.eq.s32.totalorder %s27, 1
      %p265 = por %p263, %p264
      %p267 = scmp.ne.s32.totalorder %s250, %s266
      %p268 = scmp.eq.s32.totalorder %s27, 0
      %p269 = por %p267, %p268
      %p270 = scmp.le.s32.totalorder 1, %s21
      %p271 = scmp.lt.s32.totalorder %s21, 3
      %p272 = pnand %p270, %p271
      %p273 = pneg %p272
      // Predicated region
      $region9: #{tpu_custom_call.1} parent=5 // pred_check
        _
      $region10: #{tpu_custom_call.1} parent=5 // pred_check_branch
        %275 = sbr.rel (%p272) target = $region12
      $region11: #{tpu_custom_call.1} parent=5 // pred_region
        %s276 = ssub.s32 %s21, 1
        // Predicated region
        $region13: #{tpu_custom_call.1} parent=11 // pred_check
          %p277 = pneg %p68
        $region14: #{tpu_custom_call.1} parent=11 // pred_check_branch
          %279 = sbr.rel (%p277) target = $region16
        $region15: #{tpu_custom_call.1} parent=11 // pred_region
          _
        $region16: #{tpu_custom_call.1} parent=11 // pred_fallthru
          _
        // Predicated region
        $region17: #{tpu_custom_call.1} parent=11 // pred_check
          %p280 = pneg %p89
        $region18: #{tpu_custom_call.1} parent=11 // pred_check_branch
          %282 = sbr.rel (%p280) target = $region20
        $region19: #{tpu_custom_call.1} parent=11 // pred_region
          _
        $region20: #{tpu_custom_call.1} parent=11 // pred_fallthru
          _
        // Predicated region
        $region21: #{tpu_custom_call.1} parent=11 // pred_check
          %p283 = pneg %p110
        $region22: #{tpu_custom_call.1} parent=11 // pred_check_branch
          %285 = sbr.rel (%p283) target = $region24
        $region23: #{tpu_custom_call.1} parent=11 // pred_region
          _
        $region24: #{tpu_custom_call.1} parent=11 // pred_fallthru
          _
        // Predicated region
        $region25: #{tpu_custom_call.1} parent=11 // pred_check
          %p286 = pneg %p131
        $region26: #{tpu_custom_call.1} parent=11 // pred_check_branch
          %288 = sbr.rel (%p286) target = $region28
        $region27: #{tpu_custom_call.1} parent=11 // pred_region
          _
        $region28: #{tpu_custom_call.1} parent=11 // pred_fallthru
          _
        // Predicated region
        $region29: #{tpu_custom_call.1} parent=11 // pred_check
          %p289 = pneg %p152
        $region30: #{tpu_custom_call.1} parent=11 // pred_check_branch
          %291 = sbr.rel (%p289) target = $region32
        $region31: #{tpu_custom_call.1} parent=11 // pred_region
          _
        $region32: #{tpu_custom_call.1} parent=11 // pred_fallthru
          _
        // Predicated region
        $region33: #{tpu_custom_call.1} parent=11 // pred_check
          %p292 = pneg %p173
        $region34: #{tpu_custom_call.1} parent=11 // pred_check_branch
          %294 = sbr.rel (%p292) target = $region36
        $region35: #{tpu_custom_call.1} parent=11 // pred_region
          _
        $region36: #{tpu_custom_call.1} parent=11 // pred_fallthru
          _
        // Predicated region
        $region37: #{tpu_custom_call.1} parent=11 // pred_check
          %p295 = pneg %p194
        $region38: #{tpu_custom_call.1} parent=11 // pred_check_branch
          %297 = sbr.rel (%p295) target = $region40
        $region39: #{tpu_custom_call.1} parent=11 // pred_region
          _
        $region40: #{tpu_custom_call.1} parent=11 // pred_fallthru
          _
        // Predicated region
        $region41: #{tpu_custom_call.1} parent=11 // pred_check
          %p298 = pneg %p215
        $region42: #{tpu_custom_call.1} parent=11 // pred_check_branch
          %300 = sbr.rel (%p298) target = $region44
        $region43: #{tpu_custom_call.1} parent=11 // pred_region
          _
        $region44: #{tpu_custom_call.1} parent=11 // pred_fallthru
          _
        // Predicated region
        $region45: #{tpu_custom_call.1} parent=11 // pred_check
          %p301 = pneg %p236
        $region46: #{tpu_custom_call.1} parent=11 // pred_check_branch
          %303 = sbr.rel (%p301) target = $region48
        $region47: #{tpu_custom_call.1} parent=11 // pred_region
          _
        $region48: #{tpu_custom_call.1} parent=11 // pred_fallthru
          _
      $region12: #{tpu_custom_call.1} parent=5 // pred_fallthru
        _
      %p304 = scmp.lt.s32.totalorder %s21, 2
      // Predicated region
      $region49: #{tpu_custom_call.1} parent=5 // pred_check
        %p305 = pneg %p304
      $region50: #{tpu_custom_call.1} parent=5 // pred_check_branch
        %307 = sbr.rel (%p305) target = $region52
      $region51: #{tpu_custom_call.1} parent=5 // pred_region
        // Predicated region
        $region53: #{tpu_custom_call.1} parent=51 // pred_check
          %p308 = pneg %p41
        $region54: #{tpu_custom_call.1} parent=51 // pred_check_branch
          %310 = sbr.rel (%p308) target = $region56
        $region55: #{tpu_custom_call.1} parent=51 // pred_region
          %s311 = smul.u32 32, %s21
          %p312 = scmp.lt.s32.totalorder %s311, 63
          %s313 = scalar_select %p312, %s311, 63
          %s314 = smul.addr %s313, 4
          %s315 = scalar_lea.vmem %s0, %s314
          %s316 = smul.u32 32, %s21
        $region56: #{tpu_custom_call.1} parent=51 // pred_fallthru
          _
      $region52: #{tpu_custom_call.1} parent=5 // pred_fallthru
        _
      %p317 = scmp.le.s32.totalorder 1, %s21
      %p318 = scmp.lt.s32.totalorder %s21, 3
      %p319 = pnand %p317, %p318
      %p320 = pneg %p319
      // Predicated region
      $region57: #{tpu_custom_call.1} parent=5 // pred_check
        _
      $region58: #{tpu_custom_call.1} parent=5 // pred_check_branch
        %322 = sbr.rel (%p319) target = $region60
      $region59: #{tpu_custom_call.1} parent=5 // pred_region
        %s323 = ssub.s32 %s21, 1
        %s324 = smul.u32 32, %s26
        %p325 = scmp.lt.s32.totalorder %s324, 63
        %s326 = scalar_select %p325, %s324, 63
        %s327 = smul.addr %s326, 4
        %s328 = scalar_lea.vmem %s0, %s327
        %p329 = pneg %p47
        %p330 = pneg %p44
        %p331 = pneg %p68
        %p332 = pneg %p65
        %p333 = pneg %p89
        %p334 = pneg %p86
        %p335 = pneg %p110
        %p336 = pneg %p107
        %p337 = pneg %p131
        %p338 = pneg %p128
        %p339 = pneg %p152
        %p340 = pneg %p149
        %p341 = pneg %p173
        %p342 = pneg %p170
        %p343 = pneg %p194
        %p344 = pneg %p191
        %p345 = pneg %p215
        %p346 = pneg %p212
        %p347 = pneg %p236
        %p348 = pneg %p233
        %p349 = pneg %p262
        %p350 = pneg %p259
        %s351 = sand.u32 %s249, 1
        %s352 = scalar_lea.sflag [#allocation4], %s351
        %s353 = sand.u32 %s249, 1
        %s354 = smul.addr %s353, 2
        %s355 = scalar_lea.vmem [#allocation3], %s354
        %s356 = smul.u32 32, %s26
        %p357 = scmp.lt.s32.totalorder %s356, 63
        %s358 = scalar_select %p357, %s356, 63
        %s359 = smul.addr %s358, 4
        %s360 = scalar_lea.vmem %s0, %s359
        %s361 = smul.u32 32, %s26
        %s362 = smul.u32 2, %s26
        %v364 = vld [vmem:[%s360] sm:$0xf]
        %v365 = vld [vmem:[%s360 + $0x4] sm:$0xf]
        %v366 = vld [vmem:[%s360 + $0x8] sm:$0xf]
        %v367 = vld [vmem:[%s360 + $0xc] sm:$0xf]
        %v368 = vld [vmem:[%s360 + $0x10] sm:$0xf]
        %v369 = vld [vmem:[%s360 + $0x14] sm:$0xf]
        %v370 = vld [vmem:[%s360 + $0x18] sm:$0xf]
        %v371 = vld [vmem:[%s360 + $0x1c] sm:$0xf]
        %v372 = vld [vmem:[%s360 + $0x20] sm:$0xf]
        %v373 = vld [vmem:[%s360 + $0x24] sm:$0xf]
        %v374 = vld [vmem:[%s360 + $0x28] sm:$0xf]
        %v375 = vld [vmem:[%s360 + $0x2c] sm:$0xf]
        %v376 = vld [vmem:[%s360 + $0x30] sm:$0xf]
        %v377 = vld [vmem:[%s360 + $0x34] sm:$0xf]
        %v378 = vld [vmem:[%s360 + $0x38] sm:$0xf]
        %v379 = vld [vmem:[%s360 + $0x3c] sm:$0xf]
        %v380 = vld [vmem:[%s360 + $0x40] sm:$0xf]
        %v381 = vld [vmem:[%s360 + $0x44] sm:$0xf]
        %v382 = vld [vmem:[%s360 + $0x48] sm:$0xf]
        %v383 = vld [vmem:[%s360 + $0x4c] sm:$0xf]
        %v384 = vld [vmem:[%s360 + $0x50] sm:$0xf]
        %v385 = vld [vmem:[%s360 + $0x54] sm:$0xf]
        %v386 = vld [vmem:[%s360 + $0x58] sm:$0xf]
        %v387 = vld [vmem:[%s360 + $0x5c] sm:$0xf]
        %v388 = vld [vmem:[%s360 + $0x60] sm:$0xf]
        %v389 = vld [vmem:[%s360 + $0x64] sm:$0xf]
        %v390 = vld [vmem:[%s360 + $0x68] sm:$0xf]
        %v391 = vld [vmem:[%s360 + $0x6c] sm:$0xf]
        %v392 = vld [vmem:[%s360 + $0x70] sm:$0xf]
        %v393 = vld [vmem:[%s360 + $0x74] sm:$0xf]
        %v394 = vld [vmem:[%s360 + $0x78] sm:$0xf]
        %v395 = vld [vmem:[%s360 + $0x7c] sm:$0xf]
        %v396 = vld [vmem:[%s1] sm:$0xf]
        %v397 = vld [vmem:[%s1 + $0x4] sm:$0xf]
        %v398 = vld [vmem:[%s1 + $0x8] sm:$0xf]
        %v399 = vld [vmem:[%s1 + $0xc] sm:$0xf]
        %v400 = vld [vmem:[%s2] sm:$0x1]
        %v402 = vlaneseq
        %v403 = vshrl.u32 %v402, 7
        %v404 = vsub.s32 0, %v403
        %v405 = vrot.slane %v400, %v404
        %v439 = vunpack.c.l.b16 %v364
        %v440 = vunpack.c.l.b16 %v365
        %v441 = vunpack.c.l.b16 %v366
        %v442 = vunpack.c.l.b16 %v367
        %v443 = vunpack.c.l.b16 %v368
        %v444 = vunpack.c.l.b16 %v369
        %v445 = vunpack.c.l.b16 %v370
        %v446 = vunpack.c.l.b16 %v371
        %v447 = vunpack.c.l.b16 %v372
        %v448 = vunpack.c.l.b16 %v373
        %v449 = vunpack.c.l.b16 %v374
        %v450 = vunpack.c.l.b16 %v375
        %v451 = vunpack.c.l.b16 %v376
        %v452 = vunpack.c.l.b16 %v377
        %v453 = vunpack.c.l.b16 %v378
        %v454 = vunpack.c.l.b16 %v379
        %v455 = vunpack.c.l.b16 %v380
        %v456 = vunpack.c.l.b16 %v381
        %v457 = vunpack.c.l.b16 %v382
        %v458 = vunpack.c.l.b16 %v383
        %v459 = vunpack.c.l.b16 %v384
        %v460 = vunpack.c.l.b16 %v385
        %v461 = vunpack.c.l.b16 %v386
        %v462 = vunpack.c.l.b16 %v387
        %v463 = vunpack.c.l.b16 %v388
        %v464 = vunpack.c.l.b16 %v389
        %v465 = vunpack.c.l.b16 %v390
        %v466 = vunpack.c.l.b16 %v391
        %v467 = vunpack.c.l.b16 %v392
        %v468 = vunpack.c.l.b16 %v393
        %v469 = vunpack.c.l.b16 %v394
        %v470 = vunpack.c.l.b16 %v395
        %v471 = vpack.c.b16 %v440, %v439
        %v472 = vpack.c.b16 %v442, %v441
        %v473 = vpack.c.b16 %v444, %v443
        %v474 = vpack.c.b16 %v446, %v445
        %v475 = vpack.c.b16 %v448, %v447
        %v476 = vpack.c.b16 %v450, %v449
        %v477 = vpack.c.b16 %v452, %v451
        %v478 = vpack.c.b16 %v454, %v453
        %v479 = vpack.c.b16 %v456, %v455
        %v480 = vpack.c.b16 %v458, %v457
        %v481 = vpack.c.b16 %v460, %v459
        %v482 = vpack.c.b16 %v462, %v461
        %v483 = vpack.c.b16 %v464, %v463
        %v484 = vpack.c.b16 %v466, %v465
        %v485 = vpack.c.b16 %v468, %v467
        %v486 = vpack.c.b16 %v470, %v469
        %v491 = vunpack.c.l.b16 %v396
        %v492 = vunpack.c.l.b16 %v397
        %v493 = vunpack.c.l.b16 %v398
        %v494 = vunpack.c.l.b16 %v399
        %v495 = vpack.c.b16 %v492, %v491
        %v496 = vpack.c.b16 %v494, %v493
        %vm499 = vcmask 261120
        %v501 = vsel %vm499, %v471, 0
        %v504 = vsel %vm499, %v472, 0
        %v507 = vsel %vm499, %v473, 0
        %v510 = vsel %vm499, %v474, 0
        %v513 = vsel %vm499, %v475, 0
        %v516 = vsel %vm499, %v476, 0
        %v519 = vsel %vm499, %v477, 0
        %v522 = vsel %vm499, %v478, 0
        %v525 = vsel %vm499, %v479, 0
        %v528 = vsel %vm499, %v480, 0
        %v531 = vsel %vm499, %v481, 0
        %v534 = vsel %vm499, %v482, 0
        %v537 = vsel %vm499, %v483, 0
        %v540 = vsel %vm499, %v484, 0
        %v543 = vsel %vm499, %v485, 0
        %v546 = vsel %vm499, %v486, 0
        %548 = vmatprep.subr.bf16.mxu0 0
        %549 = vmatpush1.bf16.msra.mxu0 0
        %550 = vmatprep.subr.bf16.mxu0 0
        %551 = vmatpush1.bf16.msra.mxu0 0
        %552 = vmatprep.subr.bf16.mxu0 0
        %553 = vmatpush1.bf16.msra.mxu0 0
        %554 = vmatprep.subr.bf16.mxu0 0
        %555 = vmatpush1.bf16.msra.mxu0 0
        %556 = vmatprep.subr.bf16.mxu0 0
        %557 = vmatpush1.bf16.msra.mxu0 0
        %558 = vmatprep.subr.bf16.mxu0 0
        %559 = vmatpush1.bf16.msra.mxu0 0
        %560 = vmatprep.subr.bf16.mxu0 0
        %561 = vmatpush1.bf16.msra.mxu0 %v496
        %562 = vmatprep.subr.bf16.mxu0 0
        %563 = vmatpush1.bf16.msra.mxu0 %v495
        %564 = vmatprep.subr.bf16.mxu0 0
        %565 = vmatpush2.bf16.msra.mxu0 0
        %566 = vmatprep.subr.bf16.mxu0 0
        %567 = vmatpush2.bf16.msra.mxu0 0
        %568 = vmatprep.subr.bf16.mxu0 0
        %569 = vmatpush2.bf16.msra.mxu0 0
        %570 = vmatprep.subr.bf16.mxu0 0
        %571 = vmatpush2.bf16.msra.mxu0 0
        %572 = vmatprep.subr.bf16.mxu0 0
        %573 = vmatpush2.bf16.msra.mxu0 0
        %574 = vmatprep.subr.bf16.mxu0 0
        %575 = vmatpush2.bf16.msra.mxu0 0
        %576 = vmatprep.subr.bf16.mxu0 0
        %577 = vmatpush2.bf16.msra.mxu0 0
        %578 = vmatprep.subr.bf16.mxu0 0
        %579 = vmatpush2.bf16.msra.mxu0 0
        %580 = vmatprep.mubr.bf16.mxu0 0
        %581 = vmatmul.mubr.bf16.gmra.mxu0 %v501
        %v582 = vpop.f32.mrf.mxu0
        %v583 = vadd.f32 %v405, %v582
        %v584 = vpop.f32.mrf.mxu0
        %v585 = vpop.f32.mrf.mxu0
        %v586 = vadd.f32 %v405, %v585
        %v587 = vpop.f32.mrf.mxu0
        %588 = vmatprep.mubr.bf16.mxu0 0
        %589 = vmatmul.mubr.bf16.gmra.mxu0 %v504
        %v590 = vpop.f32.mrf.mxu0
        %v591 = vadd.f32 %v405, %v590
        %v592 = vpop.f32.mrf.mxu0
        %v593 = vpop.f32.mrf.mxu0
        %v594 = vadd.f32 %v405, %v593
        %v595 = vpop.f32.mrf.mxu0
        %596 = vmatprep.mubr.bf16.mxu0 0
        %597 = vmatmul.mubr.bf16.gmra.mxu0 %v507
        %v598 = vpop.f32.mrf.mxu0
        %v599 = vadd.f32 %v405, %v598
        %v600 = vpop.f32.mrf.mxu0
        %v601 = vpop.f32.mrf.mxu0
        %v602 = vadd.f32 %v405, %v601
        %v603 = vpop.f32.mrf.mxu0
        %604 = vmatprep.mubr.bf16.mxu0 0
        %605 = vmatmul.mubr.bf16.gmra.mxu0 %v510
        %v606 = vpop.f32.mrf.mxu0
        %v607 = vadd.f32 %v405, %v606
        %v608 = vpop.f32.mrf.mxu0
        %v609 = vpop.f32.mrf.mxu0
        %v610 = vadd.f32 %v405, %v609
        %v611 = vpop.f32.mrf.mxu0
        %612 = vmatprep.mubr.bf16.mxu0 0
        %613 = vmatmul.mubr.bf16.gmra.mxu0 %v513
        %v614 = vpop.f32.mrf.mxu0
        %v615 = vadd.f32 %v405, %v614
        %v616 = vpop.f32.mrf.mxu0
        %v617 = vpop.f32.mrf.mxu0
        %v618 = vadd.f32 %v405, %v617
        %v619 = vpop.f32.mrf.mxu0
        %620 = vmatprep.mubr.bf16.mxu0 0
        %621 = vmatmul.mubr.bf16.gmra.mxu0 %v516
        %v622 = vpop.f32.mrf.mxu0
        %v623 = vadd.f32 %v405, %v622
        %v624 = vpop.f32.mrf.mxu0
        %v625 = vpop.f32.mrf.mxu0
        %v626 = vadd.f32 %v405, %v625
        %v627 = vpop.f32.mrf.mxu0
        %628 = vmatprep.mubr.bf16.mxu0 0
        %629 = vmatmul.mubr.bf16.gmra.mxu0 %v519
        %v630 = vpop.f32.mrf.mxu0
        %v631 = vadd.f32 %v405, %v630
        %v632 = vpop.f32.mrf.mxu0
        %v633 = vpop.f32.mrf.mxu0
        %v634 = vadd.f32 %v405, %v633
        %v635 = vpop.f32.mrf.mxu0
        %636 = vmatprep.mubr.bf16.mxu0 0
        %637 = vmatmul.mubr.bf16.gmra.mxu0 %v522
        %v638 = vpop.f32.mrf.mxu0
        %v639 = vadd.f32 %v405, %v638
        %v640 = vpop.f32.mrf.mxu0
        %v641 = vpop.f32.mrf.mxu0
        %v642 = vadd.f32 %v405, %v641
        %v643 = vpop.f32.mrf.mxu0
        %644 = vmatprep.mubr.bf16.mxu0 0
        %645 = vmatmul.mubr.bf16.gmra.mxu0 %v525
        %v646 = vpop.f32.mrf.mxu0
        %v647 = vadd.f32 %v405, %v646
        %v648 = vpop.f32.mrf.mxu0
        %v649 = vpop.f32.mrf.mxu0
        %v650 = vadd.f32 %v405, %v649
        %v651 = vpop.f32.mrf.mxu0
        %652 = vmatprep.mubr.bf16.mxu0 0
        %653 = vmatmul.mubr.bf16.gmra.mxu0 %v528
        %v654 = vpop.f32.mrf.mxu0
        %v655 = vadd.f32 %v405, %v654
        %v656 = vpop.f32.mrf.mxu0
        %v657 = vpop.f32.mrf.mxu0
        %v658 = vadd.f32 %v405, %v657
        %v659 = vpop.f32.mrf.mxu0
        %660 = vmatprep.mubr.bf16.mxu0 0
        %661 = vmatmul.mubr.bf16.gmra.mxu0 %v531
        %v662 = vpop.f32.mrf.mxu0
        %v663 = vadd.f32 %v405, %v662
        %v664 = vpop.f32.mrf.mxu0
        %v665 = vpop.f32.mrf.mxu0
        %v666 = vadd.f32 %v405, %v665
        %v667 = vpop.f32.mrf.mxu0
        %668 = vmatprep.mubr.bf16.mxu0 0
        %669 = vmatmul.mubr.bf16.gmra.mxu0 %v534
        %v670 = vpop.f32.mrf.mxu0
        %v671 = vadd.f32 %v405, %v670
        %v672 = vpop.f32.mrf.mxu0
        %v673 = vpop.f32.mrf.mxu0
        %v674 = vadd.f32 %v405, %v673
        %v675 = vpop.f32.mrf.mxu0
        %676 = vmatprep.mubr.bf16.mxu0 0
        %677 = vmatmul.mubr.bf16.gmra.mxu0 %v537
        %v678 = vpop.f32.mrf.mxu0
        %v679 = vadd.f32 %v405, %v678
        %v680 = vpop.f32.mrf.mxu0
        %v681 = vpop.f32.mrf.mxu0
        %v682 = vadd.f32 %v405, %v681
        %v683 = vpop.f32.mrf.mxu0
        %684 = vmatprep.mubr.bf16.mxu0 0
        %685 = vmatmul.mubr.bf16.gmra.mxu0 %v540
        %v686 = vpop.f32.mrf.mxu0
        %v687 = vadd.f32 %v405, %v686
        %v688 = vpop.f32.mrf.mxu0
        %v689 = vpop.f32.mrf.mxu0
        %v690 = vadd.f32 %v405, %v689
        %v691 = vpop.f32.mrf.mxu0
        %692 = vmatprep.mubr.bf16.mxu0 0
        %693 = vmatmul.mubr.bf16.gmra.mxu0 %v543
        %v694 = vpop.f32.mrf.mxu0
        %v695 = vadd.f32 %v405, %v694
        %v696 = vpop.f32.mrf.mxu0
        %v697 = vpop.f32.mrf.mxu0
        %v698 = vadd.f32 %v405, %v697
        %v699 = vpop.f32.mrf.mxu0
        %700 = vmatprep.mubr.bf16.mxu0 0
        %701 = vmatmul.mubr.bf16.gmra.mxu0 %v546
        %v702 = vpop.f32.mrf.mxu0
        %v703 = vadd.f32 %v405, %v702
        %v704 = vpop.f32.mrf.mxu0
        %v705 = vpop.f32.mrf.mxu0
        %v706 = vadd.f32 %v405, %v705
        %v707 = vpop.f32.mrf.mxu0
        %708 = vdwg.mxu0
        %v709 = vmax.f32 %v583, 0.0
        %v710 = vmax.f32 %v586, 0.0
        %v711 = vmax.f32 %v591, 0.0
        %v712 = vmax.f32 %v594, 0.0
        %v713 = vmax.f32 %v599, 0.0
        %v714 = vmax.f32 %v602, 0.0
        %v715 = vmax.f32 %v607, 0.0
        %v716 = vmax.f32 %v610, 0.0
        %v717 = vmax.f32 %v615, 0.0
        %v718 = vmax.f32 %v618, 0.0
        %v719 = vmax.f32 %v623, 0.0
        %v720 = vmax.f32 %v626, 0.0
        %v721 = vmax.f32 %v631, 0.0
        %v722 = vmax.f32 %v634, 0.0
        %v723 = vmax.f32 %v639, 0.0
        %v724 = vmax.f32 %v642, 0.0
        %v725 = vmax.f32 %v647, 0.0
        %v726 = vmax.f32 %v650, 0.0
        %v727 = vmax.f32 %v655, 0.0
        %v728 = vmax.f32 %v658, 0.0
        %v729 = vmax.f32 %v663, 0.0
        %v730 = vmax.f32 %v666, 0.0
        %v731 = vmax.f32 %v671, 0.0
        %v732 = vmax.f32 %v674, 0.0
        %v733 = vmax.f32 %v679, 0.0
        %v734 = vmax.f32 %v682, 0.0
        %v735 = vmax.f32 %v687, 0.0
        %v736 = vmax.f32 %v690, 0.0
        %v737 = vmax.f32 %v695, 0.0
        %v738 = vmax.f32 %v698, 0.0
        %v739 = vmax.f32 %v703, 0.0
        %v740 = vmax.f32 %v706, 0.0
        %v741 = vpack.c.bf16 %v710, %v709
        %v742 = vpack.c.bf16 %v712, %v711
        %v743 = vpack.c.bf16 %v714, %v713
        %v744 = vpack.c.bf16 %v716, %v715
        %v745 = vpack.c.bf16 %v718, %v717
        %v746 = vpack.c.bf16 %v720, %v719
        %v747 = vpack.c.bf16 %v722, %v721
        %v748 = vpack.c.bf16 %v724, %v723
        %v749 = vpack.c.bf16 %v726, %v725
        %v750 = vpack.c.bf16 %v728, %v727
        %v751 = vpack.c.bf16 %v730, %v729
        %v752 = vpack.c.bf16 %v732, %v731
        %v753 = vpack.c.bf16 %v734, %v733
        %v754 = vpack.c.bf16 %v736, %v735
        %v755 = vpack.c.bf16 %v738, %v737
        %v756 = vpack.c.bf16 %v740, %v739
        %v757 = vld [vmem:[%s3] sm:$0xf]
        %v758 = vld [vmem:[%s3 + $0x4] sm:$0xf]
        %v759 = vld [vmem:[%s3 + $0x8] sm:$0xf]
        %v760 = vld [vmem:[%s3 + $0xc] sm:$0xf]
        %v761 = vld [vmem:[%s4] sm:$0x1]
        %v763 = vlaneseq
        %v764 = vshrl.u32 %v763, 7
        %v765 = vsub.s32 0, %v764
        %v766 = vrot.slane %v761, %v765
        %v772 = vunpack.c.l.b16 %v757
        %v773 = vunpack.c.l.b16 %v758
        %v774 = vunpack.c.l.b16 %v759
        %v775 = vunpack.c.l.b16 %v760
        %v776 = vpack.c.b16 %v773, %v772
        %v777 = vpack.c.b16 %v775, %v774
        %v781 = vsel %vm499, %v741, 0
        %v784 = vsel %vm499, %v742, 0
        %v787 = vsel %vm499, %v743, 0
        %v790 = vsel %vm499, %v744, 0
        %v793 = vsel %vm499, %v745, 0
        %v796 = vsel %vm499, %v746, 0
        %v799 = vsel %vm499, %v747, 0
        %v802 = vsel %vm499, %v748, 0
        %v805 = vsel %vm499, %v749, 0
        %v808 = vsel %vm499, %v750, 0
        %v811 = vsel %vm499, %v751, 0
        %v814 = vsel %vm499, %v752, 0
        %v817 = vsel %vm499, %v753, 0
        %v820 = vsel %vm499, %v754, 0
        %v823 = vsel %vm499, %v755, 0
        %v826 = vsel %vm499, %v756, 0
        %828 = vmatprep.subr.bf16.mxu0 0
        %829 = vmatpush1.bf16.msra.mxu0 0
        %830 = vmatprep.subr.bf16.mxu0 0
        %831 = vmatpush1.bf16.msra.mxu0 0
        %832 = vmatprep.subr.bf16.mxu0 0
        %833 = vmatpush1.bf16.msra.mxu0 0
        %834 = vmatprep.subr.bf16.mxu0 0
        %835 = vmatpush1.bf16.msra.mxu0 0
        %836 = vmatprep.subr.bf16.mxu0 0
        %837 = vmatpush1.bf16.msra.mxu0 0
        %838 = vmatprep.subr.bf16.mxu0 0
        %839 = vmatpush1.bf16.msra.mxu0 0
        %840 = vmatprep.subr.bf16.mxu0 0
        %841 = vmatpush1.bf16.msra.mxu0 %v777
        %842 = vmatprep.subr.bf16.mxu0 0
        %843 = vmatpush1.bf16.msra.mxu0 %v776
        %844 = vmatprep.subr.bf16.mxu0 0
        %845 = vmatpush2.bf16.msra.mxu0 0
        %846 = vmatprep.subr.bf16.mxu0 0
        %847 = vmatpush2.bf16.msra.mxu0 0
        %848 = vmatprep.subr.bf16.mxu0 0
        %849 = vmatpush2.bf16.msra.mxu0 0
        %850 = vmatprep.subr.bf16.mxu0 0
        %851 = vmatpush2.bf16.msra.mxu0 0
        %852 = vmatprep.subr.bf16.mxu0 0
        %853 = vmatpush2.bf16.msra.mxu0 0
        %854 = vmatprep.subr.bf16.mxu0 0
        %855 = vmatpush2.bf16.msra.mxu0 0
        %856 = vmatprep.subr.bf16.mxu0 0
        %857 = vmatpush2.bf16.msra.mxu0 0
        %858 = vmatprep.subr.bf16.mxu0 0
        %859 = vmatpush2.bf16.msra.mxu0 0
        %860 = vmatprep.mubr.bf16.mxu0 0
        %861 = vmatmul.mubr.bf16.gmra.mxu0 %v781
        %v862 = vpop.f32.mrf.mxu0
        %v863 = vadd.f32 %v766, %v862
        %v864 = vpop.f32.mrf.mxu0
        %v865 = vpop.f32.mrf.mxu0
        %v866 = vadd.f32 %v766, %v865
        %v867 = vpop.f32.mrf.mxu0
        %868 = vmatprep.mubr.bf16.mxu0 0
        %869 = vmatmul.mubr.bf16.gmra.mxu0 %v784
        %v870 = vpop.f32.mrf.mxu0
        %v871 = vadd.f32 %v766, %v870
        %v872 = vpop.f32.mrf.mxu0
        %v873 = vpop.f32.mrf.mxu0
        %v874 = vadd.f32 %v766, %v873
        %v875 = vpop.f32.mrf.mxu0
        %876 = vmatprep.mubr.bf16.mxu0 0
        %877 = vmatmul.mubr.bf16.gmra.mxu0 %v787
        %v878 = vpop.f32.mrf.mxu0
        %v879 = vadd.f32 %v766, %v878
        %v880 = vpop.f32.mrf.mxu0
        %v881 = vpop.f32.mrf.mxu0
        %v882 = vadd.f32 %v766, %v881
        %v883 = vpop.f32.mrf.mxu0
        %884 = vmatprep.mubr.bf16.mxu0 0
        %885 = vmatmul.mubr.bf16.gmra.mxu0 %v790
        %v886 = vpop.f32.mrf.mxu0
        %v887 = vadd.f32 %v766, %v886
        %v888 = vpop.f32.mrf.mxu0
        %v889 = vpop.f32.mrf.mxu0
        %v890 = vadd.f32 %v766, %v889
        %v891 = vpop.f32.mrf.mxu0
        %892 = vmatprep.mubr.bf16.mxu0 0
        %893 = vmatmul.mubr.bf16.gmra.mxu0 %v793
        %v894 = vpop.f32.mrf.mxu0
        %v895 = vadd.f32 %v766, %v894
        %v896 = vpop.f32.mrf.mxu0
        %v897 = vpop.f32.mrf.mxu0
        %v898 = vadd.f32 %v766, %v897
        %v899 = vpop.f32.mrf.mxu0
        %900 = vmatprep.mubr.bf16.mxu0 0
        %901 = vmatmul.mubr.bf16.gmra.mxu0 %v796
        %v902 = vpop.f32.mrf.mxu0
        %v903 = vadd.f32 %v766, %v902
        %v904 = vpop.f32.mrf.mxu0
        %v905 = vpop.f32.mrf.mxu0
        %v906 = vadd.f32 %v766, %v905
        %v907 = vpop.f32.mrf.mxu0
        %908 = vmatprep.mubr.bf16.mxu0 0
        %909 = vmatmul.mubr.bf16.gmra.mxu0 %v799
        %v910 = vpop.f32.mrf.mxu0
        %v911 = vadd.f32 %v766, %v910
        %v912 = vpop.f32.mrf.mxu0
        %v913 = vpop.f32.mrf.mxu0
        %v914 = vadd.f32 %v766, %v913
        %v915 = vpop.f32.mrf.mxu0
        %916 = vmatprep.mubr.bf16.mxu0 0
        %917 = vmatmul.mubr.bf16.gmra.mxu0 %v802
        %v918 = vpop.f32.mrf.mxu0
        %v919 = vadd.f32 %v766, %v918
        %v920 = vpop.f32.mrf.mxu0
        %v921 = vpop.f32.mrf.mxu0
        %v922 = vadd.f32 %v766, %v921
        %v923 = vpop.f32.mrf.mxu0
        %924 = vmatprep.mubr.bf16.mxu0 0
        %925 = vmatmul.mubr.bf16.gmra.mxu0 %v805
        %v926 = vpop.f32.mrf.mxu0
        %v927 = vadd.f32 %v766, %v926
        %v928 = vpop.f32.mrf.mxu0
        %v929 = vpop.f32.mrf.mxu0
        %v930 = vadd.f32 %v766, %v929
        %v931 = vpop.f32.mrf.mxu0
        %932 = vmatprep.mubr.bf16.mxu0 0
        %933 = vmatmul.mubr.bf16.gmra.mxu0 %v808
        %v934 = vpop.f32.mrf.mxu0
        %v935 = vadd.f32 %v766, %v934
        %v936 = vpop.f32.mrf.mxu0
        %v937 = vpop.f32.mrf.mxu0
        %v938 = vadd.f32 %v766, %v937
        %v939 = vpop.f32.mrf.mxu0
        %940 = vmatprep.mubr.bf16.mxu0 0
        %941 = vmatmul.mubr.bf16.gmra.mxu0 %v811
        %v942 = vpop.f32.mrf.mxu0
        %v943 = vadd.f32 %v766, %v942
        %v944 = vpop.f32.mrf.mxu0
        %v945 = vpop.f32.mrf.mxu0
        %v946 = vadd.f32 %v766, %v945
        %v947 = vpop.f32.mrf.mxu0
        %948 = vmatprep.mubr.bf16.mxu0 0
        %949 = vmatmul.mubr.bf16.gmra.mxu0 %v814
        %v950 = vpop.f32.mrf.mxu0
        %v951 = vadd.f32 %v766, %v950
        %v952 = vpop.f32.mrf.mxu0
        %v953 = vpop.f32.mrf.mxu0
        %v954 = vadd.f32 %v766, %v953
        %v955 = vpop.f32.mrf.mxu0
        %956 = vmatprep.mubr.bf16.mxu0 0
        %957 = vmatmul.mubr.bf16.gmra.mxu0 %v817
        %v958 = vpop.f32.mrf.mxu0
        %v959 = vadd.f32 %v766, %v958
        %v960 = vpop.f32.mrf.mxu0
        %v961 = vpop.f32.mrf.mxu0
        %v962 = vadd.f32 %v766, %v961
        %v963 = vpop.f32.mrf.mxu0
        %964 = vmatprep.mubr.bf16.mxu0 0
        %965 = vmatmul.mubr.bf16.gmra.mxu0 %v820
        %v966 = vpop.f32.mrf.mxu0
        %v967 = vadd.f32 %v766, %v966
        %v968 = vpop.f32.mrf.mxu0
        %v969 = vpop.f32.mrf.mxu0
        %v970 = vadd.f32 %v766, %v969
        %v971 = vpop.f32.mrf.mxu0
        %972 = vmatprep.mubr.bf16.mxu0 0
        %973 = vmatmul.mubr.bf16.gmra.mxu0 %v823
        %v974 = vpop.f32.mrf.mxu0
        %v975 = vadd.f32 %v766, %v974
        %v976 = vpop.f32.mrf.mxu0
        %v977 = vpop.f32.mrf.mxu0
        %v978 = vadd.f32 %v766, %v977
        %v979 = vpop.f32.mrf.mxu0
        %980 = vmatprep.mubr.bf16.mxu0 0
        %981 = vmatmul.mubr.bf16.gmra.mxu0 %v826
        %v982 = vpop.f32.mrf.mxu0
        %v983 = vadd.f32 %v766, %v982
        %v984 = vpop.f32.mrf.mxu0
        %v985 = vpop.f32.mrf.mxu0
        %v986 = vadd.f32 %v766, %v985
        %v987 = vpop.f32.mrf.mxu0
        %988 = vdwg.mxu0
        %v989 = vmax.f32 %v863, 0.0
        %v990 = vmax.f32 %v866, 0.0
        %v991 = vmax.f32 %v871, 0.0
        %v992 = vmax.f32 %v874, 0.0
        %v993 = vmax.f32 %v879, 0.0
        %v994 = vmax.f32 %v882, 0.0
        %v995 = vmax.f32 %v887, 0.0
        %v996 = vmax.f32 %v890, 0.0
        %v997 = vmax.f32 %v895, 0.0
        %v998 = vmax.f32 %v898, 0.0
        %v999 = vmax.f32 %v903, 0.0
        %v1000 = vmax.f32 %v906, 0.0
        %v1001 = vmax.f32 %v911, 0.0
        %v1002 = vmax.f32 %v914, 0.0
        %v1003 = vmax.f32 %v919, 0.0
        %v1004 = vmax.f32 %v922, 0.0
        %v1005 = vmax.f32 %v927, 0.0
        %v1006 = vmax.f32 %v930, 0.0
        %v1007 = vmax.f32 %v935, 0.0
        %v1008 = vmax.f32 %v938, 0.0
        %v1009 = vmax.f32 %v943, 0.0
        %v1010 = vmax.f32 %v946, 0.0
        %v1011 = vmax.f32 %v951, 0.0
        %v1012 = vmax.f32 %v954, 0.0
        %v1013 = vmax.f32 %v959, 0.0
        %v1014 = vmax.f32 %v962, 0.0
        %v1015 = vmax.f32 %v967, 0.0
        %v1016 = vmax.f32 %v970, 0.0
        %v1017 = vmax.f32 %v975, 0.0
        %v1018 = vmax.f32 %v978, 0.0
        %v1019 = vmax.f32 %v983, 0.0
        %v1020 = vmax.f32 %v986, 0.0
        %v1021 = vunpack.c.l.bf16 %v364
        %v1022 = vunpack.c.l.bf16 %v365
        %v1023 = vunpack.c.l.bf16 %v366
        %v1024 = vunpack.c.l.bf16 %v367
        %v1025 = vunpack.c.l.bf16 %v368
        %v1026 = vunpack.c.l.bf16 %v369
        %v1027 = vunpack.c.l.bf16 %v370
        %v1028 = vunpack.c.l.bf16 %v371
        %v1029 = vunpack.c.l.bf16 %v372
        %v1030 = vunpack.c.l.bf16 %v373
        %v1031 = vunpack.c.l.bf16 %v374
        %v1032 = vunpack.c.l.bf16 %v375
        %v1033 = vunpack.c.l.bf16 %v376
        %v1034 = vunpack.c.l.bf16 %v377
        %v1035 = vunpack.c.l.bf16 %v378
        %v1036 = vunpack.c.l.bf16 %v379
        %v1037 = vunpack.c.l.bf16 %v380
        %v1038 = vunpack.c.l.bf16 %v381
        %v1039 = vunpack.c.l.bf16 %v382
        %v1040 = vunpack.c.l.bf16 %v383
        %v1041 = vunpack.c.l.bf16 %v384
        %v1042 = vunpack.c.l.bf16 %v385
        %v1043 = vunpack.c.l.bf16 %v386
        %v1044 = vunpack.c.l.bf16 %v387
        %v1045 = vunpack.c.l.bf16 %v388
        %v1046 = vunpack.c.l.bf16 %v389
        %v1047 = vunpack.c.l.bf16 %v390
        %v1048 = vunpack.c.l.bf16 %v391
        %v1049 = vunpack.c.l.bf16 %v392
        %v1050 = vunpack.c.l.bf16 %v393
        %v1051 = vunpack.c.l.bf16 %v394
        %v1052 = vunpack.c.l.bf16 %v395
        %v1053 = vld [vmem:[%s5] sm:$0x1]
        %v1054 = vlaneseq
        %v1055 = vshrl.u32 %v1054, 7
        %v1056 = vsub.s32 0, %v1055
        %v1057 = vrot.slane %v1053, %v1056
        %v1058 = vmul.f32 %v1021, %v1057
        %v1059 = vmul.f32 %v1022, %v1057
        %v1060 = vmul.f32 %v1023, %v1057
        %v1061 = vmul.f32 %v1024, %v1057
        %v1062 = vmul.f32 %v1025, %v1057
        %v1063 = vmul.f32 %v1026, %v1057
        %v1064 = vmul.f32 %v1027, %v1057
        %v1065 = vmul.f32 %v1028, %v1057
        %v1066 = vmul.f32 %v1029, %v1057
        %v1067 = vmul.f32 %v1030, %v1057
        %v1068 = vmul.f32 %v1031, %v1057
        %v1069 = vmul.f32 %v1032, %v1057
        %v1070 = vmul.f32 %v1033, %v1057
        %v1071 = vmul.f32 %v1034, %v1057
        %v1072 = vmul.f32 %v1035, %v1057
        %v1073 = vmul.f32 %v1036, %v1057
        %v1074 = vmul.f32 %v1037, %v1057
        %v1075 = vmul.f32 %v1038, %v1057
        %v1076 = vmul.f32 %v1039, %v1057
        %v1077 = vmul.f32 %v1040, %v1057
        %v1078 = vmul.f32 %v1041, %v1057
        %v1079 = vmul.f32 %v1042, %v1057
        %v1080 = vmul.f32 %v1043, %v1057
        %v1081 = vmul.f32 %v1044, %v1057
        %v1082 = vmul.f32 %v1045, %v1057
        %v1083 = vmul.f32 %v1046, %v1057
        %v1084 = vmul.f32 %v1047, %v1057
        %v1085 = vmul.f32 %v1048, %v1057
        %v1086 = vmul.f32 %v1049, %v1057
        %v1087 = vmul.f32 %v1050, %v1057
        %v1088 = vmul.f32 %v1051, %v1057
        %v1089 = vmul.f32 %v1052, %v1057
        %v1090 = vsel %vm499, %v1058, 0.0
        %1091 = vadd.xlane.f32.xlu0 %v1090
        %v1092 = vpop.xlane.xlu0 %1091
        %v1093 = vsel %vm499, %v1059, 0.0
        %1094 = vadd.xlane.f32.xlu0 %v1093
        %v1095 = vpop.xlane.xlu0 %1094
        %v1096 = vsel %vm499, %v1060, 0.0
        %1097 = vadd.xlane.f32.xlu0 %v1096
        %v1098 = vpop.xlane.xlu0 %1097
        %v1099 = vsel %vm499, %v1061, 0.0
        %1100 = vadd.xlane.f32.xlu0 %v1099
        %v1101 = vpop.xlane.xlu0 %1100
        %v1102 = vsel %vm499, %v1062, 0.0
        %1103 = vadd.xlane.f32.xlu0 %v1102
        %v1104 = vpop.xlane.xlu0 %1103
        %v1105 = vsel %vm499, %v1063, 0.0
        %1106 = vadd.xlane.f32.xlu0 %v1105
        %v1107 = vpop.xlane.xlu0 %1106
        %v1108 = vsel %vm499, %v1064, 0.0
        %1109 = vadd.xlane.f32.xlu0 %v1108
        %v1110 = vpop.xlane.xlu0 %1109
        %v1111 = vsel %vm499, %v1065, 0.0
        %1112 = vadd.xlane.f32.xlu0 %v1111
        %v1113 = vpop.xlane.xlu0 %1112
        %v1114 = vsel %vm499, %v1066, 0.0
        %1115 = vadd.xlane.f32.xlu0 %v1114
        %v1116 = vpop.xlane.xlu0 %1115
        %v1117 = vsel %vm499, %v1067, 0.0
        %1118 = vadd.xlane.f32.xlu0 %v1117
        %v1119 = vpop.xlane.xlu0 %1118
        %v1120 = vsel %vm499, %v1068, 0.0
        %1121 = vadd.xlane.f32.xlu0 %v1120
        %v1122 = vpop.xlane.xlu0 %1121
        %v1123 = vsel %vm499, %v1069, 0.0
        %1124 = vadd.xlane.f32.xlu0 %v1123
        %v1125 = vpop.xlane.xlu0 %1124
        %v1126 = vsel %vm499, %v1070, 0.0
        %1127 = vadd.xlane.f32.xlu0 %v1126
        %v1128 = vpop.xlane.xlu0 %1127
        %v1129 = vsel %vm499, %v1071, 0.0
        %1130 = vadd.xlane.f32.xlu0 %v1129
        %v1131 = vpop.xlane.xlu0 %1130
        %v1132 = vsel %vm499, %v1072, 0.0
        %1133 = vadd.xlane.f32.xlu0 %v1132
        %v1134 = vpop.xlane.xlu0 %1133
        %v1135 = vsel %vm499, %v1073, 0.0
        %1136 = vadd.xlane.f32.xlu0 %v1135
        %v1137 = vpop.xlane.xlu0 %1136
        %v1138 = vsel %vm499, %v1074, 0.0
        %1139 = vadd.xlane.f32.xlu0 %v1138
        %v1140 = vpop.xlane.xlu0 %1139
        %v1141 = vsel %vm499, %v1075, 0.0
        %1142 = vadd.xlane.f32.xlu0 %v1141
        %v1143 = vpop.xlane.xlu0 %1142
        %v1144 = vsel %vm499, %v1076, 0.0
        %1145 = vadd.xlane.f32.xlu0 %v1144
        %v1146 = vpop.xlane.xlu0 %1145
        %v1147 = vsel %vm499, %v1077, 0.0
        %1148 = vadd.xlane.f32.xlu0 %v1147
        %v1149 = vpop.xlane.xlu0 %1148
        %v1150 = vsel %vm499, %v1078, 0.0
        %1151 = vadd.xlane.f32.xlu0 %v1150
        %v1152 = vpop.xlane.xlu0 %1151
        %v1153 = vsel %vm499, %v1079, 0.0
        %1154 = vadd.xlane.f32.xlu0 %v1153
        %v1155 = vpop.xlane.xlu0 %1154
        %v1156 = vsel %vm499, %v1080, 0.0
        %1157 = vadd.xlane.f32.xlu0 %v1156
        %v1158 = vpop.xlane.xlu0 %1157
        %v1159 = vsel %vm499, %v1081, 0.0
        %1160 = vadd.xlane.f32.xlu0 %v1159
        %v1161 = vpop.xlane.xlu0 %1160
        %v1162 = vsel %vm499, %v1082, 0.0
        %1163 = vadd.xlane.f32.xlu0 %v1162
        %v1164 = vpop.xlane.xlu0 %1163
        %v1165 = vsel %vm499, %v1083, 0.0
        %1166 = vadd.xlane.f32.xlu0 %v1165
        %v1167 = vpop.xlane.xlu0 %1166
        %v1168 = vsel %vm499, %v1084, 0.0
        %1169 = vadd.xlane.f32.xlu0 %v1168
        %v1170 = vpop.xlane.xlu0 %1169
        %v1171 = vsel %vm499, %v1085, 0.0
        %1172 = vadd.xlane.f32.xlu0 %v1171
        %v1173 = vpop.xlane.xlu0 %1172
        %v1174 = vsel %vm499, %v1086, 0.0
        %1175 = vadd.xlane.f32.xlu0 %v1174
        %v1176 = vpop.xlane.xlu0 %1175
        %v1177 = vsel %vm499, %v1087, 0.0
        %1178 = vadd.xlane.f32.xlu0 %v1177
        %v1179 = vpop.xlane.xlu0 %1178
        %v1180 = vsel %vm499, %v1088, 0.0
        %1181 = vadd.xlane.f32.xlu0 %v1180
        %v1182 = vpop.xlane.xlu0 %1181
        %v1183 = vsel %vm499, %v1089, 0.0
        %1184 = vadd.xlane.f32.xlu0 %v1183
        %v1185 = vpop.xlane.xlu0 %1184
        %v1186 = vmul.f32 %v1021, %v1092
        %v1187 = vmul.f32 %v1022, %v1095
        %v1188 = vmul.f32 %v1023, %v1098
        %v1189 = vmul.f32 %v1024, %v1101
        %v1190 = vmul.f32 %v1025, %v1104
        %v1191 = vmul.f32 %v1026, %v1107
        %v1192 = vmul.f32 %v1027, %v1110
        %v1193 = vmul.f32 %v1028, %v1113
        %v1194 = vmul.f32 %v1029, %v1116
        %v1195 = vmul.f32 %v1030, %v1119
        %v1196 = vmul.f32 %v1031, %v1122
        %v1197 = vmul.f32 %v1032, %v1125
        %v1198 = vmul.f32 %v1033, %v1128
        %v1199 = vmul.f32 %v1034, %v1131
        %v1200 = vmul.f32 %v1035, %v1134
        %v1201 = vmul.f32 %v1036, %v1137
        %v1202 = vmul.f32 %v1037, %v1140
        %v1203 = vmul.f32 %v1038, %v1143
        %v1204 = vmul.f32 %v1039, %v1146
        %v1205 = vmul.f32 %v1040, %v1149
        %v1206 = vmul.f32 %v1041, %v1152
        %v1207 = vmul.f32 %v1042, %v1155
        %v1208 = vmul.f32 %v1043, %v1158
        %v1209 = vmul.f32 %v1044, %v1161
        %v1210 = vmul.f32 %v1045, %v1164
        %v1211 = vmul.f32 %v1046, %v1167
        %v1212 = vmul.f32 %v1047, %v1170
        %v1213 = vmul.f32 %v1048, %v1173
        %v1214 = vmul.f32 %v1049, %v1176
        %v1215 = vmul.f32 %v1050, %v1179
        %v1216 = vmul.f32 %v1051, %v1182
        %v1217 = vmul.f32 %v1052, %v1185
        %v1218 = vld [vmem:[%s6] sm:$0x1]
        %v1219 = vlaneseq
        %v1220 = vshrl.u32 %v1219, 7
        %v1221 = vsub.s32 0, %v1220
        %v1222 = vrot.slane %v1218, %v1221
        %v1223 = vadd.f32 %v1186, %v1222
        %v1224 = vadd.f32 %v1187, %v1222
        %v1225 = vadd.f32 %v1188, %v1222
        %v1226 = vadd.f32 %v1189, %v1222
        %v1227 = vadd.f32 %v1190, %v1222
        %v1228 = vadd.f32 %v1191, %v1222
        %v1229 = vadd.f32 %v1192, %v1222
        %v1230 = vadd.f32 %v1193, %v1222
        %v1231 = vadd.f32 %v1194, %v1222
        %v1232 = vadd.f32 %v1195, %v1222
        %v1233 = vadd.f32 %v1196, %v1222
        %v1234 = vadd.f32 %v1197, %v1222
        %v1235 = vadd.f32 %v1198, %v1222
        %v1236 = vadd.f32 %v1199, %v1222
        %v1237 = vadd.f32 %v1200, %v1222
        %v1238 = vadd.f32 %v1201, %v1222
        %v1239 = vadd.f32 %v1202, %v1222
        %v1240 = vadd.f32 %v1203, %v1222
        %v1241 = vadd.f32 %v1204, %v1222
        %v1242 = vadd.f32 %v1205, %v1222
        %v1243 = vadd.f32 %v1206, %v1222
        %v1244 = vadd.f32 %v1207, %v1222
        %v1245 = vadd.f32 %v1208, %v1222
        %v1246 = vadd.f32 %v1209, %v1222
        %v1247 = vadd.f32 %v1210, %v1222
        %v1248 = vadd.f32 %v1211, %v1222
        %v1249 = vadd.f32 %v1212, %v1222
        %v1250 = vadd.f32 %v1213, %v1222
        %v1251 = vadd.f32 %v1214, %v1222
        %v1252 = vadd.f32 %v1215, %v1222
        %v1253 = vadd.f32 %v1216, %v1222
        %v1254 = vadd.f32 %v1217, %v1222
        %v1255 = vadd.f32 %v1223, %v1021
        %v1256 = vadd.f32 %v1224, %v1022
        %v1257 = vadd.f32 %v1225, %v1023
        %v1258 = vadd.f32 %v1226, %v1024
        %v1259 = vadd.f32 %v1227, %v1025
        %v1260 = vadd.f32 %v1228, %v1026
        %v1261 = vadd.f32 %v1229, %v1027
        %v1262 = vadd.f32 %v1230, %v1028
        %v1263 = vadd.f32 %v1231, %v1029
        %v1264 = vadd.f32 %v1232, %v1030
        %v1265 = vadd.f32 %v1233, %v1031
        %v1266 = vadd.f32 %v1234, %v1032
        %v1267 = vadd.f32 %v1235, %v1033
        %v1268 = vadd.f32 %v1236, %v1034
        %v1269 = vadd.f32 %v1237, %v1035
        %v1270 = vadd.f32 %v1238, %v1036
        %v1271 = vadd.f32 %v1239, %v1037
        %v1272 = vadd.f32 %v1240, %v1038
        %v1273 = vadd.f32 %v1241, %v1039
        %v1274 = vadd.f32 %v1242, %v1040
        %v1275 = vadd.f32 %v1243, %v1041
        %v1276 = vadd.f32 %v1244, %v1042
        %v1277 = vadd.f32 %v1245, %v1043
        %v1278 = vadd.f32 %v1246, %v1044
        %v1279 = vadd.f32 %v1247, %v1045
        %v1280 = vadd.f32 %v1248, %v1046
        %v1281 = vadd.f32 %v1249, %v1047
        %v1282 = vadd.f32 %v1250, %v1048
        %v1283 = vadd.f32 %v1251, %v1049
        %v1284 = vadd.f32 %v1252, %v1050
        %v1285 = vadd.f32 %v1253, %v1051
        %v1286 = vadd.f32 %v1254, %v1052
        %v1287 = vld [vmem:[%s5 + $0x1] sm:$0x1]
        %v1288 = vlaneseq
        %v1289 = vshrl.u32 %v1288, 7
        %v1290 = vsub.s32 0, %v1289
        %v1291 = vrot.slane %v1287, %v1290
        %v1292 = vmul.f32 %v1255, %v1291
        %v1293 = vmul.f32 %v1256, %v1291
        %v1294 = vmul.f32 %v1257, %v1291
        %v1295 = vmul.f32 %v1258, %v1291
        %v1296 = vmul.f32 %v1259, %v1291
        %v1297 = vmul.f32 %v1260, %v1291
        %v1298 = vmul.f32 %v1261, %v1291
        %v1299 = vmul.f32 %v1262, %v1291
        %v1300 = vmul.f32 %v1263, %v1291
        %v1301 = vmul.f32 %v1264, %v1291
        %v1302 = vmul.f32 %v1265, %v1291
        %v1303 = vmul.f32 %v1266, %v1291
        %v1304 = vmul.f32 %v1267, %v1291
        %v1305 = vmul.f32 %v1268, %v1291
        %v1306 = vmul.f32 %v1269, %v1291
        %v1307 = vmul.f32 %v1270, %v1291
        %v1308 = vmul.f32 %v1271, %v1291
        %v1309 = vmul.f32 %v1272, %v1291
        %v1310 = vmul.f32 %v1273, %v1291
        %v1311 = vmul.f32 %v1274, %v1291
        %v1312 = vmul.f32 %v1275, %v1291
        %v1313 = vmul.f32 %v1276, %v1291
        %v1314 = vmul.f32 %v1277, %v1291
        %v1315 = vmul.f32 %v1278, %v1291
        %v1316 = vmul.f32 %v1279, %v1291
        %v1317 = vmul.f32 %v1280, %v1291
        %v1318 = vmul.f32 %v1281, %v1291
        %v1319 = vmul.f32 %v1282, %v1291
        %v1320 = vmul.f32 %v1283, %v1291
        %v1321 = vmul.f32 %v1284, %v1291
        %v1322 = vmul.f32 %v1285, %v1291
        %v1323 = vmul.f32 %v1286, %v1291
        %v1324 = vsel %vm499, %v1292, 0.0
        %1325 = vadd.xlane.f32.xlu0 %v1324
        %v1326 = vpop.xlane.xlu0 %1325
        %v1327 = vsel %vm499, %v1293, 0.0
        %1328 = vadd.xlane.f32.xlu0 %v1327
        %v1329 = vpop.xlane.xlu0 %1328
        %v1330 = vsel %vm499, %v1294, 0.0
        %1331 = vadd.xlane.f32.xlu0 %v1330
        %v1332 = vpop.xlane.xlu0 %1331
        %v1333 = vsel %vm499, %v1295, 0.0
        %1334 = vadd.xlane.f32.xlu0 %v1333
        %v1335 = vpop.xlane.xlu0 %1334
        %v1336 = vsel %vm499, %v1296, 0.0
        %1337 = vadd.xlane.f32.xlu0 %v1336
        %v1338 = vpop.xlane.xlu0 %1337
        %v1339 = vsel %vm499, %v1297, 0.0
        %1340 = vadd.xlane.f32.xlu0 %v1339
        %v1341 = vpop.xlane.xlu0 %1340
        %v1342 = vsel %vm499, %v1298, 0.0
        %1343 = vadd.xlane.f32.xlu0 %v1342
        %v1344 = vpop.xlane.xlu0 %1343
        %v1345 = vsel %vm499, %v1299, 0.0
        %1346 = vadd.xlane.f32.xlu0 %v1345
        %v1347 = vpop.xlane.xlu0 %1346
        %v1348 = vsel %vm499, %v1300, 0.0
        %1349 = vadd.xlane.f32.xlu0 %v1348
        %v1350 = vpop.xlane.xlu0 %1349
        %v1351 = vsel %vm499, %v1301, 0.0
        %1352 = vadd.xlane.f32.xlu0 %v1351
        %v1353 = vpop.xlane.xlu0 %1352
        %v1354 = vsel %vm499, %v1302, 0.0
        %1355 = vadd.xlane.f32.xlu0 %v1354
        %v1356 = vpop.xlane.xlu0 %1355
        %v1357 = vsel %vm499, %v1303, 0.0
        %1358 = vadd.xlane.f32.xlu0 %v1357
        %v1359 = vpop.xlane.xlu0 %1358
        %v1360 = vsel %vm499, %v1304, 0.0
        %1361 = vadd.xlane.f32.xlu0 %v1360
        %v1362 = vpop.xlane.xlu0 %1361
        %v1363 = vsel %vm499, %v1305, 0.0
        %1364 = vadd.xlane.f32.xlu0 %v1363
        %v1365 = vpop.xlane.xlu0 %1364
        %v1366 = vsel %vm499, %v1306, 0.0
        %1367 = vadd.xlane.f32.xlu0 %v1366
        %v1368 = vpop.xlane.xlu0 %1367
        %v1369 = vsel %vm499, %v1307, 0.0
        %1370 = vadd.xlane.f32.xlu0 %v1369
        %v1371 = vpop.xlane.xlu0 %1370
        %v1372 = vsel %vm499, %v1308, 0.0
        %1373 = vadd.xlane.f32.xlu0 %v1372
        %v1374 = vpop.xlane.xlu0 %1373
        %v1375 = vsel %vm499, %v1309, 0.0
        %1376 = vadd.xlane.f32.xlu0 %v1375
        %v1377 = vpop.xlane.xlu0 %1376
        %v1378 = vsel %vm499, %v1310, 0.0
        %1379 = vadd.xlane.f32.xlu0 %v1378
        %v1380 = vpop.xlane.xlu0 %1379
        %v1381 = vsel %vm499, %v1311, 0.0
        %1382 = vadd.xlane.f32.xlu0 %v1381
        %v1383 = vpop.xlane.xlu0 %1382
        %v1384 = vsel %vm499, %v1312, 0.0
        %1385 = vadd.xlane.f32.xlu0 %v1384
        %v1386 = vpop.xlane.xlu0 %1385
        %v1387 = vsel %vm499, %v1313, 0.0
        %1388 = vadd.xlane.f32.xlu0 %v1387
        %v1389 = vpop.xlane.xlu0 %1388
        %v1390 = vsel %vm499, %v1314, 0.0
        %1391 = vadd.xlane.f32.xlu0 %v1390
        %v1392 = vpop.xlane.xlu0 %1391
        %v1393 = vsel %vm499, %v1315, 0.0
        %1394 = vadd.xlane.f32.xlu0 %v1393
        %v1395 = vpop.xlane.xlu0 %1394
        %v1396 = vsel %vm499, %v1316, 0.0
        %1397 = vadd.xlane.f32.xlu0 %v1396
        %v1398 = vpop.xlane.xlu0 %1397
        %v1399 = vsel %vm499, %v1317, 0.0
        %1400 = vadd.xlane.f32.xlu0 %v1399
        %v1401 = vpop.xlane.xlu0 %1400
        %v1402 = vsel %vm499, %v1318, 0.0
        %1403 = vadd.xlane.f32.xlu0 %v1402
        %v1404 = vpop.xlane.xlu0 %1403
        %v1405 = vsel %vm499, %v1319, 0.0
        %1406 = vadd.xlane.f32.xlu0 %v1405
        %v1407 = vpop.xlane.xlu0 %1406
        %v1408 = vsel %vm499, %v1320, 0.0
        %1409 = vadd.xlane.f32.xlu0 %v1408
        %v1410 = vpop.xlane.xlu0 %1409
        %v1411 = vsel %vm499, %v1321, 0.0
        %1412 = vadd.xlane.f32.xlu0 %v1411
        %v1413 = vpop.xlane.xlu0 %1412
        %v1414 = vsel %vm499, %v1322, 0.0
        %1415 = vadd.xlane.f32.xlu0 %v1414
        %v1416 = vpop.xlane.xlu0 %1415
        %v1417 = vsel %vm499, %v1323, 0.0
        %1418 = vadd.xlane.f32.xlu0 %v1417
        %v1419 = vpop.xlane.xlu0 %1418
        %v1420 = vmul.f32 %v1021, %v1326
        %v1421 = vmul.f32 %v1022, %v1329
        %v1422 = vmul.f32 %v1023, %v1332
        %v1423 = vmul.f32 %v1024, %v1335
        %v1424 = vmul.f32 %v1025, %v1338
        %v1425 = vmul.f32 %v1026, %v1341
        %v1426 = vmul.f32 %v1027, %v1344
        %v1427 = vmul.f32 %v1028, %v1347
        %v1428 = vmul.f32 %v1029, %v1350
        %v1429 = vmul.f32 %v1030, %v1353
        %v1430 = vmul.f32 %v1031, %v1356
        %v1431 = vmul.f32 %v1032, %v1359
        %v1432 = vmul.f32 %v1033, %v1362
        %v1433 = vmul.f32 %v1034, %v1365
        %v1434 = vmul.f32 %v1035, %v1368
        %v1435 = vmul.f32 %v1036, %v1371
        %v1436 = vmul.f32 %v1037, %v1374
        %v1437 = vmul.f32 %v1038, %v1377
        %v1438 = vmul.f32 %v1039, %v1380
        %v1439 = vmul.f32 %v1040, %v1383
        %v1440 = vmul.f32 %v1041, %v1386
        %v1441 = vmul.f32 %v1042, %v1389
        %v1442 = vmul.f32 %v1043, %v1392
        %v1443 = vmul.f32 %v1044, %v1395
        %v1444 = vmul.f32 %v1045, %v1398
        %v1445 = vmul.f32 %v1046, %v1401
        %v1446 = vmul.f32 %v1047, %v1404
        %v1447 = vmul.f32 %v1048, %v1407
        %v1448 = vmul.f32 %v1049, %v1410
        %v1449 = vmul.f32 %v1050, %v1413
        %v1450 = vmul.f32 %v1051, %v1416
        %v1451 = vmul.f32 %v1052, %v1419
        %v1452 = vld [vmem:[%s6 + $0x1] sm:$0x1]
        %v1453 = vlaneseq
        %v1454 = vshrl.u32 %v1453, 7
        %v1455 = vsub.s32 0, %v1454
        %v1456 = vrot.slane %v1452, %v1455
        %v1457 = vadd.f32 %v1420, %v1456
        %v1458 = vadd.f32 %v1421, %v1456
        %v1459 = vadd.f32 %v1422, %v1456
        %v1460 = vadd.f32 %v1423, %v1456
        %v1461 = vadd.f32 %v1424, %v1456
        %v1462 = vadd.f32 %v1425, %v1456
        %v1463 = vadd.f32 %v1426, %v1456
        %v1464 = vadd.f32 %v1427, %v1456
        %v1465 = vadd.f32 %v1428, %v1456
        %v1466 = vadd.f32 %v1429, %v1456
        %v1467 = vadd.f32 %v1430, %v1456
        %v1468 = vadd.f32 %v1431, %v1456
        %v1469 = vadd.f32 %v1432, %v1456
        %v1470 = vadd.f32 %v1433, %v1456
        %v1471 = vadd.f32 %v1434, %v1456
        %v1472 = vadd.f32 %v1435, %v1456
        %v1473 = vadd.f32 %v1436, %v1456
        %v1474 = vadd.f32 %v1437, %v1456
        %v1475 = vadd.f32 %v1438, %v1456
        %v1476 = vadd.f32 %v1439, %v1456
        %v1477 = vadd.f32 %v1440, %v1456
        %v1478 = vadd.f32 %v1441, %v1456
        %v1479 = vadd.f32 %v1442, %v1456
        %v1480 = vadd.f32 %v1443, %v1456
        %v1481 = vadd.f32 %v1444, %v1456
        %v1482 = vadd.f32 %v1445, %v1456
        %v1483 = vadd.f32 %v1446, %v1456
        %v1484 = vadd.f32 %v1447, %v1456
        %v1485 = vadd.f32 %v1448, %v1456
        %v1486 = vadd.f32 %v1449, %v1456
        %v1487 = vadd.f32 %v1450, %v1456
        %v1488 = vadd.f32 %v1451, %v1456
        %v1489 = vadd.f32 %v1457, %v1255
        %v1490 = vadd.f32 %v1458, %v1256
        %v1491 = vadd.f32 %v1459, %v1257
        %v1492 = vadd.f32 %v1460, %v1258
        %v1493 = vadd.f32 %v1461, %v1259
        %v1494 = vadd.f32 %v1462, %v1260
        %v1495 = vadd.f32 %v1463, %v1261
        %v1496 = vadd.f32 %v1464, %v1262
        %v1497 = vadd.f32 %v1465, %v1263
        %v1498 = vadd.f32 %v1466, %v1264
        %v1499 = vadd.f32 %v1467, %v1265
        %v1500 = vadd.f32 %v1468, %v1266
        %v1501 = vadd.f32 %v1469, %v1267
        %v1502 = vadd.f32 %v1470, %v1268
        %v1503 = vadd.f32 %v1471, %v1269
        %v1504 = vadd.f32 %v1472, %v1270
        %v1505 = vadd.f32 %v1473, %v1271
        %v1506 = vadd.f32 %v1474, %v1272
        %v1507 = vadd.f32 %v1475, %v1273
        %v1508 = vadd.f32 %v1476, %v1274
        %v1509 = vadd.f32 %v1477, %v1275
        %v1510 = vadd.f32 %v1478, %v1276
        %v1511 = vadd.f32 %v1479, %v1277
        %v1512 = vadd.f32 %v1480, %v1278
        %v1513 = vadd.f32 %v1481, %v1279
        %v1514 = vadd.f32 %v1482, %v1280
        %v1515 = vadd.f32 %v1483, %v1281
        %v1516 = vadd.f32 %v1484, %v1282
        %v1517 = vadd.f32 %v1485, %v1283
        %v1518 = vadd.f32 %v1486, %v1284
        %v1519 = vadd.f32 %v1487, %v1285
        %v1520 = vadd.f32 %v1488, %v1286
        %v1521 = vld [vmem:[%s7] sm:$0x1]
        %v1522 = vpack.c.bf16 %v990, %v989
        %v1523 = vpack.c.bf16 %v992, %v991
        %v1524 = vpack.c.bf16 %v994, %v993
        %v1525 = vpack.c.bf16 %v996, %v995
        %v1526 = vpack.c.bf16 %v998, %v997
        %v1527 = vpack.c.bf16 %v1000, %v999
        %v1528 = vpack.c.bf16 %v1002, %v1001
        %v1529 = vpack.c.bf16 %v1004, %v1003
        %v1530 = vpack.c.bf16 %v1006, %v1005
        %v1531 = vpack.c.bf16 %v1008, %v1007
        %v1532 = vpack.c.bf16 %v1010, %v1009
        %v1533 = vpack.c.bf16 %v1012, %v1011
        %v1534 = vpack.c.bf16 %v1014, %v1013
        %v1535 = vpack.c.bf16 %v1016, %v1015
        %v1536 = vpack.c.bf16 %v1018, %v1017
        %v1537 = vpack.c.bf16 %v1020, %v1019
        %v1538 = vld [vmem:[%s8] sm:$0x1]
        %v1539 = vpack.c.bf16 %v1490, %v1489
        %v1540 = vpack.c.bf16 %v1492, %v1491
        %v1541 = vpack.c.bf16 %v1494, %v1493
        %v1542 = vpack.c.bf16 %v1496, %v1495
        %v1543 = vpack.c.bf16 %v1498, %v1497
        %v1544 = vpack.c.bf16 %v1500, %v1499
        %v1545 = vpack.c.bf16 %v1502, %v1501
        %v1546 = vpack.c.bf16 %v1504, %v1503
        %v1547 = vpack.c.bf16 %v1506, %v1505
        %v1548 = vpack.c.bf16 %v1508, %v1507
        %v1549 = vpack.c.bf16 %v1510, %v1509
        %v1550 = vpack.c.bf16 %v1512, %v1511
        %v1551 = vpack.c.bf16 %v1514, %v1513
        %v1552 = vpack.c.bf16 %v1516, %v1515
        %v1553 = vpack.c.bf16 %v1518, %v1517
        %v1554 = vpack.c.bf16 %v1520, %v1519
        %v1556 = vsel %vm499, %v1538, 0
        %v1559 = vsel %vm499, %v1539, 0
        %v1562 = vsel %vm499, %v1540, 0
        %v1565 = vsel %vm499, %v1541, 0
        %v1568 = vsel %vm499, %v1542, 0
        %v1571 = vsel %vm499, %v1543, 0
        %v1574 = vsel %vm499, %v1544, 0
        %v1577 = vsel %vm499, %v1545, 0
        %v1580 = vsel %vm499, %v1546, 0
        %v1583 = vsel %vm499, %v1547, 0
        %v1586 = vsel %vm499, %v1548, 0
        %v1589 = vsel %vm499, %v1549, 0
        %v1592 = vsel %vm499, %v1550, 0
        %v1595 = vsel %vm499, %v1551, 0
        %v1598 = vsel %vm499, %v1552, 0
        %v1601 = vsel %vm499, %v1553, 0
        %v1604 = vsel %vm499, %v1554, 0
        %1606 = vmatprep.subr.bf16.mxu0 0
        %1607 = vmatpush1.bf16.xpose.msra.mxu0 %v1580
        %1608 = vmatprep.subr.bf16.mxu0 0
        %1609 = vmatpush1.bf16.xpose.msra.mxu0 %v1577
        %1610 = vmatprep.subr.bf16.mxu0 0
        %1611 = vmatpush1.bf16.xpose.msra.mxu0 %v1574
        %1612 = vmatprep.subr.bf16.mxu0 0
        %1613 = vmatpush1.bf16.xpose.msra.mxu0 %v1571
        %1614 = vmatprep.subr.bf16.mxu0 0
        %1615 = vmatpush1.bf16.xpose.msra.mxu0 %v1568
        %1616 = vmatprep.subr.bf16.mxu0 0
        %1617 = vmatpush1.bf16.xpose.msra.mxu0 %v1565
        %1618 = vmatprep.subr.bf16.mxu0 0
        %1619 = vmatpush1.bf16.xpose.msra.mxu0 %v1562
        %1620 = vmatprep.subr.bf16.mxu0 0
        %1621 = vmatpush1.bf16.xpose.msra.mxu0 %v1559
        %1622 = vmatprep.subr.bf16.mxu0 0
        %1623 = vmatpush2.bf16.xpose.msra.mxu0 %v1604
        %1624 = vmatprep.subr.bf16.mxu0 0
        %1625 = vmatpush2.bf16.xpose.msra.mxu0 %v1601
        %1626 = vmatprep.subr.bf16.mxu0 0
        %1627 = vmatpush2.bf16.xpose.msra.mxu0 %v1598
        %1628 = vmatprep.subr.bf16.mxu0 0
        %1629 = vmatpush2.bf16.xpose.msra.mxu0 %v1595
        %1630 = vmatprep.subr.bf16.mxu0 0
        %1631 = vmatpush2.bf16.xpose.msra.mxu0 %v1592
        %1632 = vmatprep.subr.bf16.mxu0 0
        %1633 = vmatpush2.bf16.xpose.msra.mxu0 %v1589
        %1634 = vmatprep.subr.bf16.mxu0 0
        %1635 = vmatpush2.bf16.xpose.msra.mxu0 %v1586
        %1636 = vmatprep.subr.bf16.mxu0 0
        %1637 = vmatpush2.bf16.xpose.msra.mxu0 %v1583
        %1638 = vmatprep.mubr.bf16.mxu0 0
        %1639 = vmatmul.mubr.bf16.gmra.mxu0 %v1556
        %v1640 = vpop.f32.mrf.mxu0
        %v1641 = vadd.f32 0.0, %v1640
        %v1642 = vpop.f32.mrf.mxu0
        %v1643 = vadd.f32 0.0, %v1642
        %v1644 = vpop.f32.mrf.mxu0
        %v1645 = vpop.f32.mrf.mxu0
        %1646 = vdwg.mxu0
        %vm1647 = vcmask 130048
        %v1649 = vsel %vm1647, %v1521, 0
        %v1652 = vsel %vm1647, %v1522, 0
        %v1655 = vsel %vm1647, %v1523, 0
        %v1658 = vsel %vm1647, %v1524, 0
        %v1661 = vsel %vm1647, %v1525, 0
        %v1664 = vsel %vm1647, %v1526, 0
        %v1667 = vsel %vm1647, %v1527, 0
        %v1670 = vsel %vm1647, %v1528, 0
        %v1673 = vsel %vm1647, %v1529, 0
        %v1676 = vsel %vm1647, %v1530, 0
        %v1679 = vsel %vm1647, %v1531, 0
        %v1682 = vsel %vm1647, %v1532, 0
        %v1685 = vsel %vm1647, %v1533, 0
        %v1688 = vsel %vm1647, %v1534, 0
        %v1691 = vsel %vm1647, %v1535, 0
        %v1694 = vsel %vm1647, %v1536, 0
        %v1697 = vsel %vm1647, %v1537, 0
        %1699 = vmatprep.subr.bf16.mxu0 0
        %1700 = vmatpush1.bf16.xpose.msra.mxu0 %v1673
        %1701 = vmatprep.subr.bf16.mxu0 0
        %1702 = vmatpush1.bf16.xpose.msra.mxu0 %v1670
        %1703 = vmatprep.subr.bf16.mxu0 0
        %1704 = vmatpush1.bf16.xpose.msra.mxu0 %v1667
        %1705 = vmatprep.subr.bf16.mxu0 0
        %1706 = vmatpush1.bf16.xpose.msra.mxu0 %v1664
        %1707 = vmatprep.subr.bf16.mxu0 0
        %1708 = vmatpush1.bf16.xpose.msra.mxu0 %v1661
        %1709 = vmatprep.subr.bf16.mxu0 0
        %1710 = vmatpush1.bf16.xpose.msra.mxu0 %v1658
        %1711 = vmatprep.subr.bf16.mxu0 0
        %1712 = vmatpush1.bf16.xpose.msra.mxu0 %v1655
        %1713 = vmatprep.subr.bf16.mxu0 0
        %1714 = vmatpush1.bf16.xpose.msra.mxu0 %v1652
        %1715 = vmatprep.subr.bf16.mxu0 0
        %1716 = vmatpush2.bf16.xpose.msra.mxu0 %v1697
        %1717 = vmatprep.subr.bf16.mxu0 0
        %1718 = vmatpush2.bf16.xpose.msra.mxu0 %v1694
        %1719 = vmatprep.subr.bf16.mxu0 0
        %1720 = vmatpush2.bf16.xpose.msra.mxu0 %v1691
        %1721 = vmatprep.subr.bf16.mxu0 0
        %1722 = vmatpush2.bf16.xpose.msra.mxu0 %v1688
        %1723 = vmatprep.subr.bf16.mxu0 0
        %1724 = vmatpush2.bf16.xpose.msra.mxu0 %v1685
        %1725 = vmatprep.subr.bf16.mxu0 0
        %1726 = vmatpush2.bf16.xpose.msra.mxu0 %v1682
        %1727 = vmatprep.subr.bf16.mxu0 0
        %1728 = vmatpush2.bf16.xpose.msra.mxu0 %v1679
        %1729 = vmatprep.subr.bf16.mxu0 0
        %1730 = vmatpush2.bf16.xpose.msra.mxu0 %v1676
        %1731 = vmatprep.mubr.bf16.mxu0 0
        %1732 = vmatmul.mubr.bf16.gmra.mxu0 %v1649
        %v1733 = vpop.f32.mrf.mxu0
        %v1734 = vadd.f32 %v1641, %v1733
        %v1735 = vpop.f32.mrf.mxu0
        %v1736 = vadd.f32 %v1643, %v1735
        %v1737 = vpop.f32.mrf.mxu0
        %v1738 = vpop.f32.mrf.mxu0
        %1739 = vdwg.mxu0
        %v1740 = vld [vmem:[#allocation2] sm:$0x1]
        %1742 = vset.pattern.permute.xlu0 0
        %1743 = vperm.xlu0 %1742, %v1740
        %v1744 = vpop.permute.xlu0 %1743
        %v1746 = vlaneseq
        %v1747 = vshrl.u32 %v1746, 7
        %v1748 = vsub.s32 0, %v1747
        %v1749 = vrot.slane %v1744, %v1748
        %v1750 = vadd.f32 %v1734, %v1749
        %v1751 = vadd.f32 %v1736, %v1749
        %v1754 = vcombine.low %v1750, %v1751
        %v1756 = vunpack.c.l.s4 1966171168
        %v1757 = vunpack.c.0.s8 %v1756
        %v1758 = vlaneseq
        %v1759 = vshrl.u32 %v1758, 7
        %v1760 = vsub.s32 %v1757, %v1759
        %v1761 = vrot.slane %v1754, %v1760
        %v1763 = vunpack.c.l.s4 1966171168
        %v1764 = vunpack.c.0.s8 %v1763
        %v1765 = vlaneseq
        %v1766 = vshrl.u32 %v1765, 7
        %v1767 = vsub.s32 %v1764, %v1766
        %v1768 = vrot.slane %v1761, %v1767
        %v1770 = vlaneseq
        %vm1771 = vcmp.ge.s32.totalorder %v1770, 0
        %vm1772 = vcmp.lt.s32.totalorder %v1770, 256
        %vm1773 = vmand %vm1771, %vm1772
        %1774 = vst.msk [vmem:[%s355] sm:$0x3] %vm1773, %v1768
        %s1775 = sand.u32 %s249, 1
        %s1776 = scalar_lea.sflag [#allocation4], %s1775
        %s1777 = sand.u32 %s249, 1
        %s1778 = smul.addr %s1777, 2
        %s1779 = scalar_lea.vmem [#allocation3], %s1778
        // Predicated region
        $region61: #{tpu_custom_call.1} parent=59 // pred_check
          %p1780 = pneg %p259
        $region62: #{tpu_custom_call.1} parent=59 // pred_check_branch
          %1782 = sbr.rel (%p1780) target = $region64
        $region63: #{tpu_custom_call.1} parent=59 // pred_region
          %s1783 = smul.u32 2, %s26
          %s1785 = ssub.s32 32, 32
          %1786 = vsyncadd %s1776, %s1785
          %s1787 = smul.addr %s1783, 16
          %s1788 = scalar_lea.hbm %s10, %s1787
          %s1790 = sshll.u32 %s1779, 4
          %s1791 = int_to_ptr.vmem [resolvable:$true] %s1790
          %1793 = dma.vmem_to_hbm [thread:$0]  %s1791, 32, %s1788, %s1776
        $region64: #{tpu_custom_call.1} parent=59 // pred_fallthru
          _
      $region60: #{tpu_custom_call.1} parent=5 // pred_fallthru
        _
      %p1794 = scmp.le.s32.totalorder 2, %s21
      // Predicated region
      $region65: #{tpu_custom_call.1} parent=5 // pred_check
        %p1795 = pneg %p1794
      $region66: #{tpu_custom_call.1} parent=5 // pred_check_branch
        %1797 = sbr.rel (%p1795) target = $region68
      $region67: #{tpu_custom_call.1} parent=5 // pred_region
        %s1798 = ssub.s32 %s21, 2
        // Predicated region
        $region69: #{tpu_custom_call.1} parent=67 // pred_check
          %p1799 = pneg %p265
        $region70: #{tpu_custom_call.1} parent=67 // pred_check_branch
          %1801 = sbr.rel (%p1799) target = $region72
        $region71: #{tpu_custom_call.1} parent=67 // pred_region
          %s1802 = sand.u32 %s250, 1
          %s1803 = scalar_lea.sflag [#allocation4], %s1802
          %s1804 = sand.u32 %s250, 1
          %s1805 = smul.addr %s1804, 2
          %s1806 = scalar_lea.vmem [#allocation3], %s1805
          %1807 = dma.done %s1803, 32
        $region72: #{tpu_custom_call.1} parent=67 // pred_fallthru
          _
      $region68: #{tpu_custom_call.1} parent=5 // pred_fallthru
        _
    $region6: #{tpu_custom_call.1} parent=1 // loop_footer
      %s25 = sadd.s32 1, %s21
    $region7: #{tpu_custom_call.1} parent=1 // loop_footer_branch
      %20 = sbr.rel target = $region3
    $region8: #{tpu_custom_call.1} parent=1 // loop_exit
      _
    %1808 = vsyncpa [#allocation4], 1
    %s1809 = scalar_lea.sflag [#allocation4], 1
    %1810 = vsyncpa %s1809, 1

</llo_original>
